<compile_context>
chip_gen: v7x
topology: tpu7x:2x2x1
jax: 0.10.0
libtpu: 0.0.40
codegen_flags: <defaults>
</compile_context>

<pallas_src>
import functools

import jax
import jax.numpy as jnp
from jax import lax
from jax.experimental import pallas as pl
from jax.experimental.pallas import tpu as pltpu


# --------------------------------------------------------------------------
# Fused kernel: qkv(1x1) -> dwconv(3x3, pad 1) -> channel attention -> proj
# --------------------------------------------------------------------------

def _attention_kernel(x_ref, wqkv_ref, bqkv_ref, dwk_ref, dwb_ref, tapm_ref,
                      temp_ref, hmask_ref, wproj_ref, bproj_ref, o_ref,
                      *, H, W):
    HW = H * W
    C = x_ref.shape[1]          # dim
    del C  # (kept for clarity; slices below use wqkv_ref.shape)
    C = wqkv_ref.shape[1]
    C3 = wqkv_ref.shape[0]      # 3 * dim

    x = x_ref[0].astype(jnp.float32)                                 # (C, HW)

    # ---- 1x1 qkv conv (fused prologue): (3C, C) @ (C, HW) + b ------------
    qkv = jnp.dot(wqkv_ref[...].astype(jnp.float32), x,
                  preferred_element_type=jnp.float32)
    qkv = qkv + bqkv_ref[...].astype(jnp.float32)                    # (3C, HW)

    # ---- depthwise 3x3, stride 1, zero-pad 1: taps as lane rolls ---------
    # out[c, p] = sum_tap k[c, tap] * qkv[c, p + s_tap] * valid_tap[p]
    # with s_tap = (dh-1)*W + (dw-1); rolled[p] = qkv[(p + s) mod HW] and the
    # mask zeroes wrapped / out-of-image positions (this reproduces padding=1).
    acc = dwk_ref[4].astype(jnp.float32) * qkv                       # centre tap
    for tap in range(9):
        if tap == 4:
            continue
        dh, dw = tap // 3, tap % 3
        s = (dh - 1) * W + (dw - 1)
        shifted = pltpu.roll(qkv, shift=(-s) % HW, axis=1)
        acc = acc + (dwk_ref[tap].astype(jnp.float32) * shifted
                     * tapm_ref[tap].astype(jnp.float32))
    y = acc + dwb_ref[...].astype(jnp.float32)                       # (3C, HW)

    q = y[:C]
    k = y[C:2 * C]
    v = y[2 * C:]

    # F.normalize(dim=-1) over the spatial axis (eps = 1e-12)
    qn = q / jnp.maximum(jnp.sqrt(jnp.sum(q * q, axis=-1, keepdims=True)), 1e-12)
    kn = k / jnp.maximum(jnp.sqrt(jnp.sum(k * k, axis=-1, keepdims=True)), 1e-12)

    # per-head temperature folded into the q rows
    qn = qn * temp_ref[...].astype(jnp.float32)

    # all heads in one (C, C) gram matrix; off-head blocks masked to ~-inf
    attn = lax.dot_general(qn, kn, (((1,), (1,)), ((), ())),
                           preferred_element_type=jnp.float32)       # (C, C)
    attn = attn + hmask_ref[...].astype(jnp.float32)
    attn = attn - jnp.max(attn, axis=-1, keepdims=True)
    e = jnp.exp(attn)
    p = e / jnp.sum(e, axis=-1, keepdims=True)                       # block-diag

    out = jnp.dot(p, v, preferred_element_type=jnp.float32)          # (C, HW)

    # ---- project_out 1x1 conv (fused epilogue) ---------------------------
    out = jnp.dot(wproj_ref[...].astype(jnp.float32), out,
                  preferred_element_type=jnp.float32)
    out = out + bproj_ref[...].astype(jnp.float32)

    o_ref[0] = out.astype(o_ref.dtype)


# --------------------------------------------------------------------------
# Wrapper (NCHW in / NCHW out, matching the PyTorch module)
# --------------------------------------------------------------------------

def attention_forward(x_nchw, params, num_heads):
    B, C, H, W = x_nchw.shape
    HW = H * W
    cp = C // num_heads
    C3 = 3 * C

    x = x_nchw.reshape(B, C, HW)          # free reshape, channels on sublanes

    # Tiny constants computed once on the host side of the call.
    pos = jnp.arange(HW, dtype=jnp.int32)
    row, col = pos // W, pos % W
    masks = []
    for dh in range(3):
        for dw in range(3):
            ok = ((row + dh - 1 >= 0) & (row + dh - 1 < H) &
                  (col + dw - 1 >= 0) & (col + dw - 1 < W))
            masks.append(ok)
    tap_masks = jnp.stack(masks).astype(jnp.float32).reshape(9, 1, HW)

    head_id = jnp.arange(C, dtype=jnp.int32) // cp
    head_mask = jnp.where(head_id[:, None] == head_id[None, :],
                          0.0, -1e30).astype(jnp.float32)            # (C, C)
    temp_rows = jnp.repeat(params['temperature'].reshape(num_heads),
                           cp).reshape(C, 1).astype(jnp.float32)     # (C, 1)

    rep2 = lambda b: (0, 0)
    rep3 = lambda b: (0, 0, 0)
    out = pl.pallas_call(
        functools.partial(_attention_kernel, H=H, W=W),
        out_shape=jax.ShapeDtypeStruct((B, C, HW), x.dtype),
        grid=(B,),
        in_specs=[
            pl.BlockSpec((1, C, HW), lambda b: (b, 0, 0)),   # x (per image)
            pl.BlockSpec((C3, C), rep2),                     # qkv 1x1 weight
            pl.BlockSpec((C3, 1), rep2),                     # qkv bias
            pl.BlockSpec((9, C3, 1), rep3),                  # dw 3x3 weights
            pl.BlockSpec((C3, 1), rep2),                     # dw bias
            pl.BlockSpec((9, 1, HW), rep3),                  # tap validity masks
            pl.BlockSpec((C, 1), rep2),                      # temperature / row
            pl.BlockSpec((C, C), rep2),                      # head block mask
            pl.BlockSpec((C, C), rep2),                      # project_out weight
            pl.BlockSpec((C, 1), rep2),                      # project_out bias
        ],
        out_specs=pl.BlockSpec((1, C, HW), lambda b: (b, 0, 0)),
        compiler_params=pltpu.CompilerParams(
            dimension_semantics=("parallel",)),
    )(x, params['wqkv'], params['bqkv'], params['dwk'], params['dwb'],
      tap_masks, temp_rows, head_mask, params['wproj'], params['bproj'])

    return out.reshape(B, C, H, W)


# --------------------------------------------------------------------------
# Deterministic parameters (shapes follow the PyTorch __init__, bias=True)
# --------------------------------------------------------------------------

def init_params(key, dim, num_heads):
    C3 = 3 * dim
    ks = jax.random.split(key, 6)

    def w(k, shape, scale=0.1):
        return (scale * jax.random.normal(k, shape)).astype(jnp.float32)

    return {
        'temperature': jnp.ones((num_heads, 1, 1), jnp.float32),
        'wqkv': w(ks[0], (C3, dim)),     # Conv2d(dim, 3*dim, 1) weight
        'bqkv': w(ks[1], (C3, 1)),
        'dwk': w(ks[2], (9, C3, 1)),     # depthwise 3x3, tap-major
        'dwb': w(ks[3], (C3, 1)),
        'wproj': w(ks[4], (dim, dim)),   # Conv2d(dim, dim, 1) weight
        'bproj': w(ks[5], (dim, 1)),
    }


# --------------------------------------------------------------------------
# Pure-JAX reference (mirrors the PyTorch forward) for a correctness check
# --------------------------------------------------------------------------

def attention_reference(x, p, num_heads):
    B, C, H, W = x.shape
    HW = H * W
    cp = C // num_heads
    hp = jax.lax.Precision.HIGHEST

    xf = x.reshape(B, C, HW).astype(jnp.float32)
    qkv = jnp.einsum('oc,bcp->bop', p['wqkv'], xf, precision=hp)
    qkv = (qkv + p['bqkv'].reshape(1, 3 * C, 1)).reshape(B, 3 * C, H, W)

    qp = jnp.pad(qkv, ((0, 0), (0, 0), (1, 1), (1, 1)))
    dwo = jnp.zeros_like(qkv)
    for dh in range(3):
        for dwi in range(3):
            kc = p['dwk'][dh * 3 + dwi, :, 0].reshape(1, 3 * C, 1, 1)
            dwo = dwo + kc * qp[:, :, dh:dh + H, dwi:dwi + W]
    dwo = dwo + p['dwb'].reshape(1, 3 * C, 1, 1)

    q, k, v = jnp.split(dwo.reshape(B, 3 * C, HW), 3, axis=1)
    heads = lambda a: a.reshape(B, num_heads, cp, HW)
    q, k, v = heads(q), heads(k), heads(v)
    qn = q / jnp.maximum(jnp.sqrt(jnp.sum(q * q, -1, keepdims=True)), 1e-12)
    kn = k / jnp.maximum(jnp.sqrt(jnp.sum(k * k, -1, keepdims=True)), 1e-12)
    attn = jnp.einsum('bhcp,bhdp->bhcd', qn, kn, precision=hp)
    attn = attn * p['temperature'].reshape(1, num_heads, 1, 1)
    attn = jax.nn.softmax(attn, axis=-1)
    o = jnp.einsum('bhcd,bhdp->bhcp', attn, v, precision=hp).reshape(B, C, HW)
    o = jnp.einsum('oc,bcp->bop', p['wproj'], o, precision=hp)
    o = o + p['bproj'].reshape(1, C, 1)
    return o.reshape(B, C, H, W)


if __name__ == "__main__":
    dim, num_heads = 4, 2
    B, H, W = 2, 16, 16

    key = jax.random.PRNGKey(0)
    kx, kp = jax.random.split(key)
    x = jax.random.normal(kx, (B, dim, H, W), jnp.float32)
    params = init_params(kp, dim, num_heads)

    out = attention_forward(x, params, num_heads)
    out = jax.block_until_ready(out)
    assert out.shape == x.shape and out.dtype == x.dtype
    assert bool(jnp.all(jnp.isfinite(out)))

    ref = attention_reference(x, params, num_heads)
    err = float(jnp.max(jnp.abs(out - ref)))
    assert err < 1e-3, f"mismatch vs reference: {err}"
    print("KERNEL_OK")
</pallas_src>

<mosaic_0001>
module attributes {stable_mosaic.version = 11 : i64} {
  func.func @_attention_kernel(%arg0: i32, %arg1: memref<1x4x256xf32, #tpu.memory_space<vmem>>, %arg2: memref<12x4xf32, #tpu.memory_space<vmem>>, %arg3: memref<12x1xf32, #tpu.memory_space<vmem>>, %arg4: memref<9x12x1xf32, #tpu.memory_space<vmem>>, %arg5: memref<12x1xf32, #tpu.memory_space<vmem>>, %arg6: memref<9x1x256xf32, #tpu.memory_space<vmem>>, %arg7: memref<4x1xf32, #tpu.memory_space<vmem>>, %arg8: memref<4x4xf32, #tpu.memory_space<vmem>>, %arg9: memref<4x4xf32, #tpu.memory_space<vmem>>, %arg10: memref<4x1xf32, #tpu.memory_space<vmem>>, %arg11: memref<1x4x256xf32, #tpu.memory_space<vmem>>) attributes {dimension_semantics = [#tpu.dimension_semantics<parallel>], iteration_bounds = array<i64: 2>, scalar_prefetch = 0 : i64, scratch_operands = 0 : i64, tpu.core_type = #tpu.core_type<tc>, window_params = [{transform_indices = @transform_0, window_bounds = array<i64: 1, 4, 256>}, {pipeline_mode = #tpu.pipeline_mode<synchronous>, transform_indices = @transform_1, window_bounds = array<i64: 12, 4>}, {pipeline_mode = #tpu.pipeline_mode<synchronous>, transform_indices = @transform_2, window_bounds = array<i64: 12, 1>}, {pipeline_mode = #tpu.pipeline_mode<synchronous>, transform_indices = @transform_3, window_bounds = array<i64: 9, 12, 1>}, {pipeline_mode = #tpu.pipeline_mode<synchronous>, transform_indices = @transform_4, window_bounds = array<i64: 12, 1>}, {pipeline_mode = #tpu.pipeline_mode<synchronous>, transform_indices = @transform_5, window_bounds = array<i64: 9, 1, 256>}, {pipeline_mode = #tpu.pipeline_mode<synchronous>, transform_indices = @transform_6, window_bounds = array<i64: 4, 1>}, {pipeline_mode = #tpu.pipeline_mode<synchronous>, transform_indices = @transform_7, window_bounds = array<i64: 4, 4>}, {pipeline_mode = #tpu.pipeline_mode<synchronous>, transform_indices = @transform_8, window_bounds = array<i64: 4, 4>}, {pipeline_mode = #tpu.pipeline_mode<synchronous>, transform_indices = @transform_9, window_bounds = array<i64: 4, 1>}, {transform_indices = @transform_10, window_bounds = array<i64: 1, 4, 256>}]} {
    %c0 = arith.constant 0 : index
    %c0_0 = arith.constant 0 : index
    %c0_1 = arith.constant 0 : index
    %0 = vector.load %arg1[%c0, %c0_0, %c0_1] : memref<1x4x256xf32, #tpu.memory_space<vmem>>, vector<1x4x256xf32>
    %1 = vector.shape_cast %0 : vector<1x4x256xf32> to vector<4x256xf32>
    %c0_2 = arith.constant 0 : index
    %c0_3 = arith.constant 0 : index
    %2 = vector.load %arg2[%c0_2, %c0_3] : memref<12x4xf32, #tpu.memory_space<vmem>>, vector<12x4xf32>
    %cst = arith.constant dense<0.000000e+00> : vector<12x256xf32>
    %3 = tpu.matmul %2, %1, %cst {dimension_numbers = #tpu.dot_dimension_numbers<[1], [0], [0], [1], [0, 0, 1, 1], [], []>} : vector<12x4xf32>, vector<4x256xf32>, vector<12x256xf32> -> vector<12x256xf32>
    %c0_4 = arith.constant 0 : index
    %c0_5 = arith.constant 0 : index
    %4 = vector.load %arg3[%c0_4, %c0_5] : memref<12x1xf32, #tpu.memory_space<vmem>>, vector<12x1xf32>
    %5 = vector.broadcast %4 : vector<12x1xf32> to vector<12x256xf32>
    %6 = arith.addf %3, %5 : vector<12x256xf32>
    %c4 = arith.constant 4 : index
    %c0_6 = arith.constant 0 : index
    %c0_7 = arith.constant 0 : index
    %7 = vector.load %arg4[%c4, %c0_6, %c0_7] : memref<9x12x1xf32, #tpu.memory_space<vmem>>, vector<1x12x1xf32>
    %8 = vector.shape_cast %7 : vector<1x12x1xf32> to vector<12x1xf32>
    %9 = vector.broadcast %8 : vector<12x1xf32> to vector<12x256xf32>
    %10 = arith.mulf %9, %6 : vector<12x256xf32>
    %c17_i32 = arith.constant 17 : i32
    %11 = tpu.dynamic_rotate %6 by %c17_i32 dim 1 : vector<12x256xf32>, i32 -> vector<12x256xf32>
    %c0_8 = arith.constant 0 : index
    %c0_9 = arith.constant 0 : index
    %c0_10 = arith.constant 0 : index
    %12 = vector.load %arg4[%c0_8, %c0_9, %c0_10] : memref<9x12x1xf32, #tpu.memory_space<vmem>>, vector<1x12x1xf32>
    %13 = vector.shape_cast %12 : vector<1x12x1xf32> to vector<12x1xf32>
    %14 = vector.broadcast %13 : vector<12x1xf32> to vector<12x256xf32>
    %15 = arith.mulf %14, %11 : vector<12x256xf32>
    %c0_11 = arith.constant 0 : index
    %c0_12 = arith.constant 0 : index
    %c0_13 = arith.constant 0 : index
    %16 = vector.load %arg6[%c0_11, %c0_12, %c0_13] : memref<9x1x256xf32, #tpu.memory_space<vmem>>, vector<1x1x256xf32>
    %17 = vector.shape_cast %16 : vector<1x1x256xf32> to vector<1x256xf32>
    %18 = vector.broadcast %17 : vector<1x256xf32> to vector<12x256xf32>
    %19 = arith.mulf %15, %18 : vector<12x256xf32>
    %20 = arith.addf %10, %19 : vector<12x256xf32>
    %c16_i32 = arith.constant 16 : i32
    %21 = tpu.dynamic_rotate %6 by %c16_i32 dim 1 : vector<12x256xf32>, i32 -> vector<12x256xf32>
    %c1 = arith.constant 1 : index
    %c0_14 = arith.constant 0 : index
    %c0_15 = arith.constant 0 : index
    %22 = vector.load %arg4[%c1, %c0_14, %c0_15] : memref<9x12x1xf32, #tpu.memory_space<vmem>>, vector<1x12x1xf32>
    %23 = vector.shape_cast %22 : vector<1x12x1xf32> to vector<12x1xf32>
    %24 = vector.broadcast %23 : vector<12x1xf32> to vector<12x256xf32>
    %25 = arith.mulf %24, %21 : vector<12x256xf32>
    %c1_16 = arith.constant 1 : index
    %c0_17 = arith.constant 0 : index
    %c0_18 = arith.constant 0 : index
    %26 = vector.load %arg6[%c1_16, %c0_17, %c0_18] : memref<9x1x256xf32, #tpu.memory_space<vmem>>, vector<1x1x256xf32>
    %27 = vector.shape_cast %26 : vector<1x1x256xf32> to vector<1x256xf32>
    %28 = vector.broadcast %27 : vector<1x256xf32> to vector<12x256xf32>
    %29 = arith.mulf %25, %28 : vector<12x256xf32>
    %30 = arith.addf %20, %29 : vector<12x256xf32>
    %c15_i32 = arith.constant 15 : i32
    %31 = tpu.dynamic_rotate %6 by %c15_i32 dim 1 : vector<12x256xf32>, i32 -> vector<12x256xf32>
    %c2 = arith.constant 2 : index
    %c0_19 = arith.constant 0 : index
    %c0_20 = arith.constant 0 : index
    %32 = vector.load %arg4[%c2, %c0_19, %c0_20] : memref<9x12x1xf32, #tpu.memory_space<vmem>>, vector<1x12x1xf32>
    %33 = vector.shape_cast %32 : vector<1x12x1xf32> to vector<12x1xf32>
    %34 = vector.broadcast %33 : vector<12x1xf32> to vector<12x256xf32>
    %35 = arith.mulf %34, %31 : vector<12x256xf32>
    %c2_21 = arith.constant 2 : index
    %c0_22 = arith.constant 0 : index
    %c0_23 = arith.constant 0 : index
    %36 = vector.load %arg6[%c2_21, %c0_22, %c0_23] : memref<9x1x256xf32, #tpu.memory_space<vmem>>, vector<1x1x256xf32>
    %37 = vector.shape_cast %36 : vector<1x1x256xf32> to vector<1x256xf32>
    %38 = vector.broadcast %37 : vector<1x256xf32> to vector<12x256xf32>
    %39 = arith.mulf %35, %38 : vector<12x256xf32>
    %40 = arith.addf %30, %39 : vector<12x256xf32>
    %c1_i32 = arith.constant 1 : i32
    %41 = tpu.dynamic_rotate %6 by %c1_i32 dim 1 : vector<12x256xf32>, i32 -> vector<12x256xf32>
    %c3 = arith.constant 3 : index
    %c0_24 = arith.constant 0 : index
    %c0_25 = arith.constant 0 : index
    %42 = vector.load %arg4[%c3, %c0_24, %c0_25] : memref<9x12x1xf32, #tpu.memory_space<vmem>>, vector<1x12x1xf32>
    %43 = vector.shape_cast %42 : vector<1x12x1xf32> to vector<12x1xf32>
    %44 = vector.broadcast %43 : vector<12x1xf32> to vector<12x256xf32>
    %45 = arith.mulf %44, %41 : vector<12x256xf32>
    %c3_26 = arith.constant 3 : index
    %c0_27 = arith.constant 0 : index
    %c0_28 = arith.constant 0 : index
    %46 = vector.load %arg6[%c3_26, %c0_27, %c0_28] : memref<9x1x256xf32, #tpu.memory_space<vmem>>, vector<1x1x256xf32>
    %47 = vector.shape_cast %46 : vector<1x1x256xf32> to vector<1x256xf32>
    %48 = vector.broadcast %47 : vector<1x256xf32> to vector<12x256xf32>
    %49 = arith.mulf %45, %48 : vector<12x256xf32>
    %50 = arith.addf %40, %49 : vector<12x256xf32>
    %c255_i32 = arith.constant 255 : i32
    %51 = tpu.dynamic_rotate %6 by %c255_i32 dim 1 : vector<12x256xf32>, i32 -> vector<12x256xf32>
    %c5 = arith.constant 5 : index
    %c0_29 = arith.constant 0 : index
    %c0_30 = arith.constant 0 : index
    %52 = vector.load %arg4[%c5, %c0_29, %c0_30] : memref<9x12x1xf32, #tpu.memory_space<vmem>>, vector<1x12x1xf32>
    %53 = vector.shape_cast %52 : vector<1x12x1xf32> to vector<12x1xf32>
    %54 = vector.broadcast %53 : vector<12x1xf32> to vector<12x256xf32>
    %55 = arith.mulf %54, %51 : vector<12x256xf32>
    %c5_31 = arith.constant 5 : index
    %c0_32 = arith.constant 0 : index
    %c0_33 = arith.constant 0 : index
    %56 = vector.load %arg6[%c5_31, %c0_32, %c0_33] : memref<9x1x256xf32, #tpu.memory_space<vmem>>, vector<1x1x256xf32>
    %57 = vector.shape_cast %56 : vector<1x1x256xf32> to vector<1x256xf32>
    %58 = vector.broadcast %57 : vector<1x256xf32> to vector<12x256xf32>
    %59 = arith.mulf %55, %58 : vector<12x256xf32>
    %60 = arith.addf %50, %59 : vector<12x256xf32>
    %c241_i32 = arith.constant 241 : i32
    %61 = tpu.dynamic_rotate %6 by %c241_i32 dim 1 : vector<12x256xf32>, i32 -> vector<12x256xf32>
    %c6 = arith.constant 6 : index
    %c0_34 = arith.constant 0 : index
    %c0_35 = arith.constant 0 : index
    %62 = vector.load %arg4[%c6, %c0_34, %c0_35] : memref<9x12x1xf32, #tpu.memory_space<vmem>>, vector<1x12x1xf32>
    %63 = vector.shape_cast %62 : vector<1x12x1xf32> to vector<12x1xf32>
    %64 = vector.broadcast %63 : vector<12x1xf32> to vector<12x256xf32>
    %65 = arith.mulf %64, %61 : vector<12x256xf32>
    %c6_36 = arith.constant 6 : index
    %c0_37 = arith.constant 0 : index
    %c0_38 = arith.constant 0 : index
    %66 = vector.load %arg6[%c6_36, %c0_37, %c0_38] : memref<9x1x256xf32, #tpu.memory_space<vmem>>, vector<1x1x256xf32>
    %67 = vector.shape_cast %66 : vector<1x1x256xf32> to vector<1x256xf32>
    %68 = vector.broadcast %67 : vector<1x256xf32> to vector<12x256xf32>
    %69 = arith.mulf %65, %68 : vector<12x256xf32>
    %70 = arith.addf %60, %69 : vector<12x256xf32>
    %c240_i32 = arith.constant 240 : i32
    %71 = tpu.dynamic_rotate %6 by %c240_i32 dim 1 : vector<12x256xf32>, i32 -> vector<12x256xf32>
    %c7 = arith.constant 7 : index
    %c0_39 = arith.constant 0 : index
    %c0_40 = arith.constant 0 : index
    %72 = vector.load %arg4[%c7, %c0_39, %c0_40] : memref<9x12x1xf32, #tpu.memory_space<vmem>>, vector<1x12x1xf32>
    %73 = vector.shape_cast %72 : vector<1x12x1xf32> to vector<12x1xf32>
    %74 = vector.broadcast %73 : vector<12x1xf32> to vector<12x256xf32>
    %75 = arith.mulf %74, %71 : vector<12x256xf32>
    %c7_41 = arith.constant 7 : index
    %c0_42 = arith.constant 0 : index
    %c0_43 = arith.constant 0 : index
    %76 = vector.load %arg6[%c7_41, %c0_42, %c0_43] : memref<9x1x256xf32, #tpu.memory_space<vmem>>, vector<1x1x256xf32>
    %77 = vector.shape_cast %76 : vector<1x1x256xf32> to vector<1x256xf32>
    %78 = vector.broadcast %77 : vector<1x256xf32> to vector<12x256xf32>
    %79 = arith.mulf %75, %78 : vector<12x256xf32>
    %80 = arith.addf %70, %79 : vector<12x256xf32>
    %c239_i32 = arith.constant 239 : i32
    %81 = tpu.dynamic_rotate %6 by %c239_i32 dim 1 : vector<12x256xf32>, i32 -> vector<12x256xf32>
    %c8 = arith.constant 8 : index
    %c0_44 = arith.constant 0 : index
    %c0_45 = arith.constant 0 : index
    %82 = vector.load %arg4[%c8, %c0_44, %c0_45] : memref<9x12x1xf32, #tpu.memory_space<vmem>>, vector<1x12x1xf32>
    %83 = vector.shape_cast %82 : vector<1x12x1xf32> to vector<12x1xf32>
    %84 = vector.broadcast %83 : vector<12x1xf32> to vector<12x256xf32>
    %85 = arith.mulf %84, %81 : vector<12x256xf32>
    %c8_46 = arith.constant 8 : index
    %c0_47 = arith.constant 0 : index
    %c0_48 = arith.constant 0 : index
    %86 = vector.load %arg6[%c8_46, %c0_47, %c0_48] : memref<9x1x256xf32, #tpu.memory_space<vmem>>, vector<1x1x256xf32>
    %87 = vector.shape_cast %86 : vector<1x1x256xf32> to vector<1x256xf32>
    %88 = vector.broadcast %87 : vector<1x256xf32> to vector<12x256xf32>
    %89 = arith.mulf %85, %88 : vector<12x256xf32>
    %90 = arith.addf %80, %89 : vector<12x256xf32>
    %c0_49 = arith.constant 0 : index
    %c0_50 = arith.constant 0 : index
    %91 = vector.load %arg5[%c0_49, %c0_50] : memref<12x1xf32, #tpu.memory_space<vmem>>, vector<12x1xf32>
    %92 = vector.broadcast %91 : vector<12x1xf32> to vector<12x256xf32>
    %93 = arith.addf %90, %92 : vector<12x256xf32>
    %94 = vector.extract_strided_slice %93 {offsets = [0, 0], sizes = [4, 256], strides = [1, 1]} : vector<12x256xf32> to vector<4x256xf32>
    %95 = vector.extract_strided_slice %93 {offsets = [4, 0], sizes = [4, 256], strides = [1, 1]} : vector<12x256xf32> to vector<4x256xf32>
    %96 = vector.extract_strided_slice %93 {offsets = [8, 0], sizes = [4, 256], strides = [1, 1]} : vector<12x256xf32> to vector<4x256xf32>
    %97 = arith.mulf %94, %94 : vector<4x256xf32>
    %cst_51 = arith.constant dense<0.000000e+00> : vector<4xf32>
    %98 = vector.multi_reduction <add>, %97, %cst_51 [1] : vector<4x256xf32> to vector<4xf32>
    %99 = vector.shape_cast %98 : vector<4xf32> to vector<4x1xf32>
    %100 = math.sqrt %99 : vector<4x1xf32>
    %cst_52 = arith.constant 9.99999996E-13 : f32
    %101 = vector.broadcast %cst_52 : f32 to vector<4x1xf32>
    %102 = arith.maximumf %100, %101 : vector<4x1xf32>
    %103 = vector.broadcast %102 : vector<4x1xf32> to vector<4x256xf32>
    %104 = arith.divf %94, %103 : vector<4x256xf32>
    %105 = arith.mulf %95, %95 : vector<4x256xf32>
    %cst_53 = arith.constant dense<0.000000e+00> : vector<4xf32>
    %106 = vector.multi_reduction <add>, %105, %cst_53 [1] : vector<4x256xf32> to vector<4xf32>
    %107 = vector.shape_cast %106 : vector<4xf32> to vector<4x1xf32>
    %108 = math.sqrt %107 : vector<4x1xf32>
    %cst_54 = arith.constant 9.99999996E-13 : f32
    %109 = vector.broadcast %cst_54 : f32 to vector<4x1xf32>
    %110 = arith.maximumf %108, %109 : vector<4x1xf32>
    %111 = vector.broadcast %110 : vector<4x1xf32> to vector<4x256xf32>
    %112 = arith.divf %95, %111 : vector<4x256xf32>
    %c0_55 = arith.constant 0 : index
    %c0_56 = arith.constant 0 : index
    %113 = vector.load %arg7[%c0_55, %c0_56] : memref<4x1xf32, #tpu.memory_space<vmem>>, vector<4x1xf32>
    %114 = vector.broadcast %113 : vector<4x1xf32> to vector<4x256xf32>
    %115 = arith.mulf %104, %114 : vector<4x256xf32>
    %cst_57 = arith.constant dense<0.000000e+00> : vector<4x4xf32>
    %116 = tpu.matmul %115, %112, %cst_57 {dimension_numbers = #tpu.dot_dimension_numbers<[1], [1], [0], [0], [0, 0, 1, 0], [], []>} : vector<4x256xf32>, vector<4x256xf32>, vector<4x4xf32> -> vector<4x4xf32>
    %c0_58 = arith.constant 0 : index
    %c0_59 = arith.constant 0 : index
    %117 = vector.load %arg8[%c0_58, %c0_59] : memref<4x4xf32, #tpu.memory_space<vmem>>, vector<4x4xf32>
    %118 = arith.addf %116, %117 : vector<4x4xf32>
    %cst_60 = arith.constant dense<0xFF800000> : vector<4xf32>
    %119 = vector.multi_reduction <maximumf>, %118, %cst_60 [1] : vector<4x4xf32> to vector<4xf32>
    %120 = vector.shape_cast %119 : vector<4xf32> to vector<4x1xf32>
    %121 = vector.broadcast %120 : vector<4x1xf32> to vector<4x4xf32>
    %122 = arith.subf %118, %121 : vector<4x4xf32>
    %123 = math.exp %122 : vector<4x4xf32>
    %cst_61 = arith.constant dense<0.000000e+00> : vector<4xf32>
    %124 = vector.multi_reduction <add>, %123, %cst_61 [1] : vector<4x4xf32> to vector<4xf32>
    %125 = vector.shape_cast %124 : vector<4xf32> to vector<4x1xf32>
    %126 = vector.broadcast %125 : vector<4x1xf32> to vector<4x4xf32>
    %127 = arith.divf %123, %126 : vector<4x4xf32>
    %cst_62 = arith.constant dense<0.000000e+00> : vector<4x256xf32>
    %128 = tpu.matmul %127, %96, %cst_62 {dimension_numbers = #tpu.dot_dimension_numbers<[1], [0], [0], [1], [0, 0, 1, 1], [], []>} : vector<4x4xf32>, vector<4x256xf32>, vector<4x256xf32> -> vector<4x256xf32>
    %c0_63 = arith.constant 0 : index
    %c0_64 = arith.constant 0 : index
    %129 = vector.load %arg9[%c0_63, %c0_64] : memref<4x4xf32, #tpu.memory_space<vmem>>, vector<4x4xf32>
    %cst_65 = arith.constant dense<0.000000e+00> : vector<4x256xf32>
    %130 = tpu.matmul %129, %128, %cst_65 {dimension_numbers = #tpu.dot_dimension_numbers<[1], [0], [0], [1], [0, 0, 1, 1], [], []>} : vector<4x4xf32>, vector<4x256xf32>, vector<4x256xf32> -> vector<4x256xf32>
    %c0_66 = arith.constant 0 : index
    %c0_67 = arith.constant 0 : index
    %131 = vector.load %arg10[%c0_66, %c0_67] : memref<4x1xf32, #tpu.memory_space<vmem>>, vector<4x1xf32>
    %132 = vector.broadcast %131 : vector<4x1xf32> to vector<4x256xf32>
    %133 = arith.addf %130, %132 : vector<4x256xf32>
    %c0_68 = arith.constant 0 : index
    %c0_69 = arith.constant 0 : index
    %c0_70 = arith.constant 0 : index
    %134 = vector.load %arg11[%c0_68, %c0_69, %c0_70] : memref<1x4x256xf32, #tpu.memory_space<vmem>>, vector<1x4x256xf32>
    %135 = vector.shape_cast %134 : vector<1x4x256xf32> to vector<4x256xf32>
    %136 = vector.shape_cast %133 : vector<4x256xf32> to vector<1x4x256xf32>
    tpu.vector_store %arg11[%c0_68, %c0_69, %c0_70], %136 {strides = array<i32>} : memref<1x4x256xf32, #tpu.memory_space<vmem>>, vector<1x4x256xf32>,
    return
  }
  func.func @transform_0(%arg0: i32) -> (i32, i32, i32) {
    %c0_i32 = arith.constant 0 : i32
    %c0_i32_0 = arith.constant 0 : i32
    %c0_i32_1 = arith.constant 0 : i32
    return %arg0, %c0_i32, %c0_i32_0 : i32, i32, i32
  }
  func.func @transform_1(%arg0: i32) -> (i32, i32) {
    %c0_i32 = arith.constant 0 : i32
    %c0_i32_0 = arith.constant 0 : i32
    %c0_i32_1 = arith.constant 0 : i32
    return %c0_i32, %c0_i32_0 : i32, i32
  }
  func.func @transform_2(%arg0: i32) -> (i32, i32) {
    %c0_i32 = arith.constant 0 : i32
    %c0_i32_0 = arith.constant 0 : i32
    %c0_i32_1 = arith.constant 0 : i32
    return %c0_i32, %c0_i32_0 : i32, i32
  }
  func.func @transform_3(%arg0: i32) -> (i32, i32, i32) {
    %c0_i32 = arith.constant 0 : i32
    %c0_i32_0 = arith.constant 0 : i32
    %c0_i32_1 = arith.constant 0 : i32
    %c0_i32_2 = arith.constant 0 : i32
    return %c0_i32, %c0_i32_0, %c0_i32_1 : i32, i32, i32
  }
  func.func @transform_4(%arg0: i32) -> (i32, i32) {
    %c0_i32 = arith.constant 0 : i32
    %c0_i32_0 = arith.constant 0 : i32
    %c0_i32_1 = arith.constant 0 : i32
    return %c0_i32, %c0_i32_0 : i32, i32
  }
  func.func @transform_5(%arg0: i32) -> (i32, i32, i32) {
    %c0_i32 = arith.constant 0 : i32
    %c0_i32_0 = arith.constant 0 : i32
    %c0_i32_1 = arith.constant 0 : i32
    %c0_i32_2 = arith.constant 0 : i32
    return %c0_i32, %c0_i32_0, %c0_i32_1 : i32, i32, i32
  }
  func.func @transform_6(%arg0: i32) -> (i32, i32) {
    %c0_i32 = arith.constant 0 : i32
    %c0_i32_0 = arith.constant 0 : i32
    %c0_i32_1 = arith.constant 0 : i32
    return %c0_i32, %c0_i32_0 : i32, i32
  }
  func.func @transform_7(%arg0: i32) -> (i32, i32) {
    %c0_i32 = arith.constant 0 : i32
    %c0_i32_0 = arith.constant 0 : i32
    %c0_i32_1 = arith.constant 0 : i32
    return %c0_i32, %c0_i32_0 : i32, i32
  }
  func.func @transform_8(%arg0: i32) -> (i32, i32) {
    %c0_i32 = arith.constant 0 : i32
    %c0_i32_0 = arith.constant 0 : i32
    %c0_i32_1 = arith.constant 0 : i32
    return %c0_i32, %c0_i32_0 : i32, i32
  }
  func.func @transform_9(%arg0: i32) -> (i32, i32) {
    %c0_i32 = arith.constant 0 : i32
    %c0_i32_0 = arith.constant 0 : i32
    %c0_i32_1 = arith.constant 0 : i32
    return %c0_i32, %c0_i32_0 : i32, i32
  }
  func.func @transform_10(%arg0: i32) -> (i32, i32, i32) {
    %c0_i32 = arith.constant 0 : i32
    %c0_i32_0 = arith.constant 0 : i32
    %c0_i32_1 = arith.constant 0 : i32
    return %arg0, %c0_i32, %c0_i32_0 : i32, i32, i32
  }
}

</mosaic_0001>

<llo_original>
// kernel: tpu_custom_call.1
$region0: #{tpu_custom_call.1}
  #allocation0 [shape = 'u32[]', space=smem, size = 0x4, offset = 0x4, fixed_abs, tag = 'smem constant byte address 0x4 - core index']
  #allocation1 [shape = 'u32[144,128]{1,0:T(1,128)}', space=vmem, size = 0x12000, scoped, tag = 'internal scratch']
  %s0 = inlined_call_operand.vmem [shape: f32[2,4,256], index: 0, kind: input, shape index: {}]
  %s1 = inlined_call_operand.vmem [shape: f32[12,4], index: 1, kind: input, shape index: {}]
  %s2 = inlined_call_operand.vmem [shape: f32[12,1], index: 2, kind: input, shape index: {}]
  %s3 = inlined_call_operand.vmem [shape: f32[9,12,1], index: 3, kind: input, shape index: {}]
  %s4 = inlined_call_operand.vmem [shape: f32[12,1], index: 4, kind: input, shape index: {}]
  %s5 = inlined_call_operand.vmem [shape: f32[9,1,256], index: 5, kind: input, shape index: {}]
  %s6 = inlined_call_operand.vmem [shape: f32[4,1], index: 6, kind: input, shape index: {}]
  %s7 = inlined_call_operand.vmem [shape: f32[4,4], index: 7, kind: input, shape index: {}]
  %s8 = inlined_call_operand.vmem [shape: f32[4,4], index: 8, kind: input, shape index: {}]
  %s9 = inlined_call_operand.vmem [shape: f32[4,1], index: 9, kind: input, shape index: {}]
  %s10 = inlined_call_operand.hbm [shape: f32[2,4,256], index: 10, kind: output, shape index: {}]
  %s11 = sld [smem:[#allocation0]]
  $region73: #{tpu_custom_call.1} parent=0
    _
  %s13 = ssub.s32 1, %s11
  %s14 = scalar_select 0, %s13, %s11
  $region1: #{tpu_custom_call.1} parent=0
    #allocation2 [shape = 'u8[8192]{0}', space=vmem, size = 0x2000, scoped, tag = 'output window, operand 0']
    #allocation3 [shape = 's32[2]{0}', space=sflag, size = 0x8, scoped, tag = 'scoped memory for tpu_custom_call.1']
    %15 = vsyncpa [#allocation3], 0
    %s16 = scalar_lea.sflag [#allocation3], 1
    %17 = vsyncpa %s16, 0
    loop: start=0, step=1, limit=4
    $region2: #{tpu_custom_call.1} parent=1 // loop_pre_header
      _
    $region3: #{tpu_custom_call.1} parent=1 // loop_header
      %s19 = sphi 0, %s23
      %p20 = scmp.ge.s32.totalorder %s19, 4
      %s29 = sphi 0, %s31
      %s32 = sphi 0, %s29
      %s33 = sphi 0, %s32
      %s49 = sphi 0, %s33
      %s53 = sphi 0, %s53
      %s55 = sphi 0, %s53
      %s56 = sphi 0, %s55
      %s70 = sphi 0, %s56
      %s74 = sphi 0, %s74
      %s76 = sphi 0, %s74
      %s77 = sphi 0, %s76
      %s91 = sphi 0, %s77
      %s95 = sphi 0, %s95
      %s97 = sphi 0, %s95
      %s98 = sphi 0, %s97
      %s112 = sphi 0, %s98
      %s116 = sphi 0, %s116
      %s118 = sphi 0, %s116
      %s119 = sphi 0, %s118
      %s133 = sphi 0, %s119
      %s137 = sphi 0, %s137
      %s139 = sphi 0, %s137
      %s140 = sphi 0, %s139
      %s154 = sphi 0, %s140
      %s158 = sphi 0, %s158
      %s160 = sphi 0, %s158
      %s161 = sphi 0, %s160
      %s175 = sphi 0, %s161
      %s179 = sphi 0, %s179
      %s181 = sphi 0, %s179
      %s182 = sphi 0, %s181
      %s196 = sphi 0, %s182
      %s200 = sphi 0, %s200
      %s202 = sphi 0, %s200
      %s203 = sphi 0, %s202
      %s217 = sphi 0, %s203
      %s221 = sphi 0, %s221
      %s223 = sphi 0, %s221
      %s224 = sphi 0, %s223
      %s238 = sphi 0, %s224
      %s244 = sphi 0, %s246
      %s247 = sphi 0, %s244
      %s248 = sphi 0, %s247
      %s264 = sphi 0, %s248
    $region4: #{tpu_custom_call.1} parent=1 // loop_header_branch
      %22 = sbr.rel (%p20) target = $region8
    $region5: #{tpu_custom_call.1} parent=1 // loop_body
      %s24 = ssub.s32 %s19, 1
      %s25 = ssub.s32 %s19, 2
      %s26 = sadd.s32 %s19, 1
      %s27 = ssub.s32 %s19, %s26
      %p28 = scmp.eq.s32.totalorder %s27, 0
      %s30 = sadd.s32 %s29, 1
      %s31 = scalar_select %p28, %s29, %s30
      %p34 = pneg %p28
      %p35 = scmp.eq.s32.totalorder %s19, 1
      %p36 = por %p34, %p35
      %p37 = scmp.ne.s32.totalorder %s29, %s32
      %p38 = scmp.eq.s32.totalorder %s19, 0
      %p39 = por %p37, %p38
      %p40 = scmp.ne.s32.totalorder %s29, %s32
      %p41 = scmp.eq.s32.totalorder %s24, 1
      %p42 = por %p40, %p41
      %p43 = scmp.ne.s32.totalorder %s32, %s33
      %p44 = scmp.eq.s32.totalorder %s24, 0
      %p45 = por %p43, %p44
      %p46 = scmp.ne.s32.totalorder %s32, %s33
      %p47 = scmp.eq.s32.totalorder %s25, 1
      %p48 = por %p46, %p47
      %p50 = scmp.ne.s32.totalorder %s33, %s49
      %p51 = scmp.eq.s32.totalorder %s25, 0
      %p52 = por %p50, %p51
      %s54 = sadd.s32 %s53, 1
      %p57 = scmp.eq.s32.totalorder %s19, 1
      %p58 = scmp.ne.s32.totalorder %s53, %s55
      %p59 = scmp.eq.s32.totalorder %s19, 0
      %p60 = por %p58, %p59
      %p61 = scmp.ne.s32.totalorder %s53, %s55
      %p62 = scmp.eq.s32.totalorder %s24, 1
      %p63 = por %p61, %p62
      %p64 = scmp.ne.s32.totalorder %s55, %s56
      %p65 = scmp.eq.s32.totalorder %s24, 0
      %p66 = por %p64, %p65
      %p67 = scmp.ne.s32.totalorder %s55, %s56
      %p68 = scmp.eq.s32.totalorder %s25, 1
      %p69 = por %p67, %p68
      %p71 = scmp.ne.s32.totalorder %s56, %s70
      %p72 = scmp.eq.s32.totalorder %s25, 0
      %p73 = por %p71, %p72
      %s75 = sadd.s32 %s74, 1
      %p78 = scmp.eq.s32.totalorder %s19, 1
      %p79 = scmp.ne.s32.totalorder %s74, %s76
      %p80 = scmp.eq.s32.totalorder %s19, 0
      %p81 = por %p79, %p80
      %p82 = scmp.ne.s32.totalorder %s74, %s76
      %p83 = scmp.eq.s32.totalorder %s24, 1
      %p84 = por %p82, %p83
      %p85 = scmp.ne.s32.totalorder %s76, %s77
      %p86 = scmp.eq.s32.totalorder %s24, 0
      %p87 = por %p85, %p86
      %p88 = scmp.ne.s32.totalorder %s76, %s77
      %p89 = scmp.eq.s32.totalorder %s25, 1
      %p90 = por %p88, %p89
      %p92 = scmp.ne.s32.totalorder %s77, %s91
      %p93 = scmp.eq.s32.totalorder %s25, 0
      %p94 = por %p92, %p93
      %s96 = sadd.s32 %s95, 1
      %p99 = scmp.eq.s32.totalorder %s19, 1
      %p100 = scmp.ne.s32.totalorder %s95, %s97
      %p101 = scmp.eq.s32.totalorder %s19, 0
      %p102 = por %p100, %p101
      %p103 = scmp.ne.s32.totalorder %s95, %s97
      %p104 = scmp.eq.s32.totalorder %s24, 1
      %p105 = por %p103, %p104
      %p106 = scmp.ne.s32.totalorder %s97, %s98
      %p107 = scmp.eq.s32.totalorder %s24, 0
      %p108 = por %p106, %p107
      %p109 = scmp.ne.s32.totalorder %s97, %s98
      %p110 = scmp.eq.s32.totalorder %s25, 1
      %p111 = por %p109, %p110
      %p113 = scmp.ne.s32.totalorder %s98, %s112
      %p114 = scmp.eq.s32.totalorder %s25, 0
      %p115 = por %p113, %p114
      %s117 = sadd.s32 %s116, 1
      %p120 = scmp.eq.s32.totalorder %s19, 1
      %p121 = scmp.ne.s32.totalorder %s116, %s118
      %p122 = scmp.eq.s32.totalorder %s19, 0
      %p123 = por %p121, %p122
      %p124 = scmp.ne.s32.totalorder %s116, %s118
      %p125 = scmp.eq.s32.totalorder %s24, 1
      %p126 = por %p124, %p125
      %p127 = scmp.ne.s32.totalorder %s118, %s119
      %p128 = scmp.eq.s32.totalorder %s24, 0
      %p129 = por %p127, %p128
      %p130 = scmp.ne.s32.totalorder %s118, %s119
      %p131 = scmp.eq.s32.totalorder %s25, 1
      %p132 = por %p130, %p131
      %p134 = scmp.ne.s32.totalorder %s119, %s133
      %p135 = scmp.eq.s32.totalorder %s25, 0
      %p136 = por %p134, %p135
      %s138 = sadd.s32 %s137, 1
      %p141 = scmp.eq.s32.totalorder %s19, 1
      %p142 = scmp.ne.s32.totalorder %s137, %s139
      %p143 = scmp.eq.s32.totalorder %s19, 0
      %p144 = por %p142, %p143
      %p145 = scmp.ne.s32.totalorder %s137, %s139
      %p146 = scmp.eq.s32.totalorder %s24, 1
      %p147 = por %p145, %p146
      %p148 = scmp.ne.s32.totalorder %s139, %s140
      %p149 = scmp.eq.s32.totalorder %s24, 0
      %p150 = por %p148, %p149
      %p151 = scmp.ne.s32.totalorder %s139, %s140
      %p152 = scmp.eq.s32.totalorder %s25, 1
      %p153 = por %p151, %p152
      %p155 = scmp.ne.s32.totalorder %s140, %s154
      %p156 = scmp.eq.s32.totalorder %s25, 0
      %p157 = por %p155, %p156
      %s159 = sadd.s32 %s158, 1
      %p162 = scmp.eq.s32.totalorder %s19, 1
      %p163 = scmp.ne.s32.totalorder %s158, %s160
      %p164 = scmp.eq.s32.totalorder %s19, 0
      %p165 = por %p163, %p164
      %p166 = scmp.ne.s32.totalorder %s158, %s160
      %p167 = scmp.eq.s32.totalorder %s24, 1
      %p168 = por %p166, %p167
      %p169 = scmp.ne.s32.totalorder %s160, %s161
      %p170 = scmp.eq.s32.totalorder %s24, 0
      %p171 = por %p169, %p170
      %p172 = scmp.ne.s32.totalorder %s160, %s161
      %p173 = scmp.eq.s32.totalorder %s25, 1
      %p174 = por %p172, %p173
      %p176 = scmp.ne.s32.totalorder %s161, %s175
      %p177 = scmp.eq.s32.totalorder %s25, 0
      %p178 = por %p176, %p177
      %s180 = sadd.s32 %s179, 1
      %p183 = scmp.eq.s32.totalorder %s19, 1
      %p184 = scmp.ne.s32.totalorder %s179, %s181
      %p185 = scmp.eq.s32.totalorder %s19, 0
      %p186 = por %p184, %p185
      %p187 = scmp.ne.s32.totalorder %s179, %s181
      %p188 = scmp.eq.s32.totalorder %s24, 1
      %p189 = por %p187, %p188
      %p190 = scmp.ne.s32.totalorder %s181, %s182
      %p191 = scmp.eq.s32.totalorder %s24, 0
      %p192 = por %p190, %p191
      %p193 = scmp.ne.s32.totalorder %s181, %s182
      %p194 = scmp.eq.s32.totalorder %s25, 1
      %p195 = por %p193, %p194
      %p197 = scmp.ne.s32.totalorder %s182, %s196
      %p198 = scmp.eq.s32.totalorder %s25, 0
      %p199 = por %p197, %p198
      %s201 = sadd.s32 %s200, 1
      %p204 = scmp.eq.s32.totalorder %s19, 1
      %p205 = scmp.ne.s32.totalorder %s200, %s202
      %p206 = scmp.eq.s32.totalorder %s19, 0
      %p207 = por %p205, %p206
      %p208 = scmp.ne.s32.totalorder %s200, %s202
      %p209 = scmp.eq.s32.totalorder %s24, 1
      %p210 = por %p208, %p209
      %p211 = scmp.ne.s32.totalorder %s202, %s203
      %p212 = scmp.eq.s32.totalorder %s24, 0
      %p213 = por %p211, %p212
      %p214 = scmp.ne.s32.totalorder %s202, %s203
      %p215 = scmp.eq.s32.totalorder %s25, 1
      %p216 = por %p214, %p215
      %p218 = scmp.ne.s32.totalorder %s203, %s217
      %p219 = scmp.eq.s32.totalorder %s25, 0
      %p220 = por %p218, %p219
      %s222 = sadd.s32 %s221, 1
      %p225 = scmp.eq.s32.totalorder %s19, 1
      %p226 = scmp.ne.s32.totalorder %s221, %s223
      %p227 = scmp.eq.s32.totalorder %s19, 0
      %p228 = por %p226, %p227
      %p229 = scmp.ne.s32.totalorder %s221, %s223
      %p230 = scmp.eq.s32.totalorder %s24, 1
      %p231 = por %p229, %p230
      %p232 = scmp.ne.s32.totalorder %s223, %s224
      %p233 = scmp.eq.s32.totalorder %s24, 0
      %p234 = por %p232, %p233
      %p235 = scmp.ne.s32.totalorder %s223, %s224
      %p236 = scmp.eq.s32.totalorder %s25, 1
      %p237 = por %p235, %p236
      %p239 = scmp.ne.s32.totalorder %s224, %s238
      %p240 = scmp.eq.s32.totalorder %s25, 0
      %p241 = por %p239, %p240
      %s242 = ssub.s32 %s19, %s26
      %p243 = scmp.eq.s32.totalorder %s242, 0
      %s245 = sadd.s32 %s244, 1
      %s246 = scalar_select %p243, %s244, %s245
      %p249 = pneg %p243
      %p250 = scmp.eq.s32.totalorder %s19, 1
      %p251 = por %p249, %p250
      %p252 = scmp.ne.s32.totalorder %s244, %s247
      %p253 = scmp.eq.s32.totalorder %s19, 0
      %p254 = por %p252, %p253
      %p255 = scmp.ne.s32.totalorder %s244, %s247
      %p256 = scmp.eq.s32.totalorder %s24, 1
      %p257 = por %p255, %p256
      %p258 = scmp.ne.s32.totalorder %s247, %s248
      %p259 = scmp.eq.s32.totalorder %s24, 0
      %p260 = por %p258, %p259
      %p261 = scmp.ne.s32.totalorder %s247, %s248
      %p262 = scmp.eq.s32.totalorder %s25, 1
      %p263 = por %p261, %p262
      %p265 = scmp.ne.s32.totalorder %s248, %s264
      %p266 = scmp.eq.s32.totalorder %s25, 0
      %p267 = por %p265, %p266
      %p268 = scmp.le.s32.totalorder 1, %s19
      %p269 = scmp.lt.s32.totalorder %s19, 3
      %p270 = pnand %p268, %p269
      %p271 = pneg %p270
      // Predicated region
      $region9: #{tpu_custom_call.1} parent=5 // pred_check
        _
      $region10: #{tpu_custom_call.1} parent=5 // pred_check_branch
        %273 = sbr.rel (%p270) target = $region12
      $region11: #{tpu_custom_call.1} parent=5 // pred_region
        %s274 = ssub.s32 %s19, 1
        // Predicated region
        $region13: #{tpu_custom_call.1} parent=11 // pred_check
          %p275 = pneg %p66
        $region14: #{tpu_custom_call.1} parent=11 // pred_check_branch
          %277 = sbr.rel (%p275) target = $region16
        $region15: #{tpu_custom_call.1} parent=11 // pred_region
          _
        $region16: #{tpu_custom_call.1} parent=11 // pred_fallthru
          _
        // Predicated region
        $region17: #{tpu_custom_call.1} parent=11 // pred_check
          %p278 = pneg %p87
        $region18: #{tpu_custom_call.1} parent=11 // pred_check_branch
          %280 = sbr.rel (%p278) target = $region20
        $region19: #{tpu_custom_call.1} parent=11 // pred_region
          _
        $region20: #{tpu_custom_call.1} parent=11 // pred_fallthru
          _
        // Predicated region
        $region21: #{tpu_custom_call.1} parent=11 // pred_check
          %p281 = pneg %p108
        $region22: #{tpu_custom_call.1} parent=11 // pred_check_branch
          %283 = sbr.rel (%p281) target = $region24
        $region23: #{tpu_custom_call.1} parent=11 // pred_region
          _
        $region24: #{tpu_custom_call.1} parent=11 // pred_fallthru
          _
        // Predicated region
        $region25: #{tpu_custom_call.1} parent=11 // pred_check
          %p284 = pneg %p129
        $region26: #{tpu_custom_call.1} parent=11 // pred_check_branch
          %286 = sbr.rel (%p284) target = $region28
        $region27: #{tpu_custom_call.1} parent=11 // pred_region
          _
        $region28: #{tpu_custom_call.1} parent=11 // pred_fallthru
          _
        // Predicated region
        $region29: #{tpu_custom_call.1} parent=11 // pred_check
          %p287 = pneg %p150
        $region30: #{tpu_custom_call.1} parent=11 // pred_check_branch
          %289 = sbr.rel (%p287) target = $region32
        $region31: #{tpu_custom_call.1} parent=11 // pred_region
          _
        $region32: #{tpu_custom_call.1} parent=11 // pred_fallthru
          _
        // Predicated region
        $region33: #{tpu_custom_call.1} parent=11 // pred_check
          %p290 = pneg %p171
        $region34: #{tpu_custom_call.1} parent=11 // pred_check_branch
          %292 = sbr.rel (%p290) target = $region36
        $region35: #{tpu_custom_call.1} parent=11 // pred_region
          _
        $region36: #{tpu_custom_call.1} parent=11 // pred_fallthru
          _
        // Predicated region
        $region37: #{tpu_custom_call.1} parent=11 // pred_check
          %p293 = pneg %p192
        $region38: #{tpu_custom_call.1} parent=11 // pred_check_branch
          %295 = sbr.rel (%p293) target = $region40
        $region39: #{tpu_custom_call.1} parent=11 // pred_region
          _
        $region40: #{tpu_custom_call.1} parent=11 // pred_fallthru
          _
        // Predicated region
        $region41: #{tpu_custom_call.1} parent=11 // pred_check
          %p296 = pneg %p213
        $region42: #{tpu_custom_call.1} parent=11 // pred_check_branch
          %298 = sbr.rel (%p296) target = $region44
        $region43: #{tpu_custom_call.1} parent=11 // pred_region
          _
        $region44: #{tpu_custom_call.1} parent=11 // pred_fallthru
          _
        // Predicated region
        $region45: #{tpu_custom_call.1} parent=11 // pred_check
          %p299 = pneg %p234
        $region46: #{tpu_custom_call.1} parent=11 // pred_check_branch
          %301 = sbr.rel (%p299) target = $region48
        $region47: #{tpu_custom_call.1} parent=11 // pred_region
          _
        $region48: #{tpu_custom_call.1} parent=11 // pred_fallthru
          _
      $region12: #{tpu_custom_call.1} parent=5 // pred_fallthru
        _
      %p302 = scmp.lt.s32.totalorder %s19, 2
      // Predicated region
      $region49: #{tpu_custom_call.1} parent=5 // pred_check
        %p303 = pneg %p302
      $region50: #{tpu_custom_call.1} parent=5 // pred_check_branch
        %305 = sbr.rel (%p303) target = $region52
      $region51: #{tpu_custom_call.1} parent=5 // pred_region
        // Predicated region
        $region53: #{tpu_custom_call.1} parent=51 // pred_check
          %p306 = pneg %p39
        $region54: #{tpu_custom_call.1} parent=51 // pred_check_branch
          %308 = sbr.rel (%p306) target = $region56
        $region55: #{tpu_custom_call.1} parent=51 // pred_region
          %p309 = scmp.lt.s32.totalorder %s19, 1
          %s310 = scalar_select %p309, %s19, 1
          %s311 = smul.addr %s310, 2
          %s312 = smul.addr %s311, 4
          %s313 = scalar_lea.vmem %s0, %s312
        $region56: #{tpu_custom_call.1} parent=51 // pred_fallthru
          _
      $region52: #{tpu_custom_call.1} parent=5 // pred_fallthru
        _
      %p314 = scmp.le.s32.totalorder 1, %s19
      %p315 = scmp.lt.s32.totalorder %s19, 3
      %p316 = pnand %p314, %p315
      %p317 = pneg %p316
      // Predicated region
      $region57: #{tpu_custom_call.1} parent=5 // pred_check
        _
      $region58: #{tpu_custom_call.1} parent=5 // pred_check_branch
        %319 = sbr.rel (%p316) target = $region60
      $region59: #{tpu_custom_call.1} parent=5 // pred_region
        %s320 = ssub.s32 %s19, 1
        %p321 = scmp.lt.s32.totalorder %s24, 1
        %s322 = scalar_select %p321, %s24, 1
        %s323 = smul.addr %s322, 2
        %s324 = smul.addr %s323, 4
        %s325 = scalar_lea.vmem %s0, %s324
        %p326 = pneg %p45
        %p327 = pneg %p42
        %p328 = pneg %p66
        %p329 = pneg %p63
        %p330 = pneg %p87
        %p331 = pneg %p84
        %p332 = pneg %p108
        %p333 = pneg %p105
        %p334 = pneg %p129
        %p335 = pneg %p126
        %p336 = pneg %p150
        %p337 = pneg %p147
        %p338 = pneg %p171
        %p339 = pneg %p168
        %p340 = pneg %p192
        %p341 = pneg %p189
        %p342 = pneg %p213
        %p343 = pneg %p210
        %p344 = pneg %p234
        %p345 = pneg %p231
        %p346 = pneg %p260
        %p347 = pneg %p257
        %s348 = sand.u32 %s247, 1
        %s349 = scalar_lea.sflag [#allocation3], %s348
        %s350 = sand.u32 %s247, 1
        %s351 = smul.addr %s350, 8
        %s352 = scalar_lea.vmem [#allocation2], %s351
        %p353 = scmp.lt.s32.totalorder %s24, 1
        %s354 = scalar_select %p353, %s24, 1
        %s355 = smul.addr %s354, 2
        %s356 = smul.addr %s355, 4
        %s357 = scalar_lea.vmem %s0, %s356
        %v358 = vld [vmem:[%s357] sm:$0xff]
        %v359 = vld [vmem:[%s1] sm:$0xff]
        %v360 = vld [vmem:[%s1 + $0x8] sm:$0xf]
        %v361 = vld [vmem:[%s2] sm:$0xff]
        %v362 = vld [vmem:[%s2 + $0x8] sm:$0xf]
        %364 = vset.pattern.permute.xlu0 0
        %365 = vperm.xlu0 %364, %v361
        %v366 = vpop.permute.xlu0 %365
        %369 = vset.pattern.permute.xlu0 0
        %370 = vperm.xlu0 %369, %v362
        %v371 = vpop.permute.xlu0 %370
        %v374 = vcombine.high %v358, %v358
        %vm375 = vcmask 31744
        %v377 = vsel %vm375, %v359, 0
        %v380 = vsel %vm375, %v360, 0
        %vm382 = vcmask 1043456
        %v383 = vsel %vm382, %v358, 0
        %v385 = vsel %vm382, %v374, 0
        %387 = vmatprep.subr.mxu0 %v385
        %388 = vmatpush1.msra.mxu0 %v383
        %389 = vmatprep.subr.mxu0 0.0
        %390 = vmatpush1.msra.mxu0 0.0
        %391 = vmatprep.subr.mxu0 0.0
        %392 = vmatpush1.msra.mxu0 0.0
        %393 = vmatprep.subr.mxu0 0.0
        %394 = vmatpush1.msra.mxu0 0.0
        %395 = vmatprep.subr.mxu0 0.0
        %396 = vmatpush1.msra.mxu0 0.0
        %397 = vmatprep.subr.mxu0 0.0
        %398 = vmatpush1.msra.mxu0 0.0
        %399 = vmatprep.subr.mxu0 0.0
        %400 = vmatpush1.msra.mxu0 0.0
        %401 = vmatprep.subr.mxu0 0.0
        %402 = vmatpush1.msra.mxu0 0.0
        %403 = vmatprep.subr.mxu0 0.0
        %404 = vmatpush1.msra.mxu0 0.0
        %405 = vmatprep.subr.mxu0 0.0
        %406 = vmatpush1.msra.mxu0 0.0
        %407 = vmatprep.subr.mxu0 0.0
        %408 = vmatpush1.msra.mxu0 0.0
        %409 = vmatprep.subr.mxu0 0.0
        %410 = vmatpush1.msra.mxu0 0.0
        %411 = vmatprep.subr.mxu0 0.0
        %412 = vmatpush1.msra.mxu0 0.0
        %413 = vmatprep.subr.mxu0 0.0
        %414 = vmatpush1.msra.mxu0 0.0
        %415 = vmatprep.subr.mxu0 0.0
        %416 = vmatpush1.msra.mxu0 0.0
        %417 = vmatprep.subr.mxu0 0.0
        %418 = vmatpush1.msra.mxu0 0.0
        %419 = vmatprep.subr.mxu0 0.0
        %420 = vmatpush1.msra.mxu0 0.0
        %421 = vmatprep.subr.mxu0 0.0
        %422 = vmatpush1.msra.mxu0 0.0
        %423 = vmatprep.subr.mxu0 0.0
        %424 = vmatpush1.msra.mxu0 0.0
        %425 = vmatprep.subr.mxu0 0.0
        %426 = vmatpush1.msra.mxu0 0.0
        %427 = vmatprep.subr.mxu0 0.0
        %428 = vmatpush1.msra.mxu0 0.0
        %429 = vmatprep.subr.mxu0 0.0
        %430 = vmatpush1.msra.mxu0 0.0
        %431 = vmatprep.subr.mxu0 0.0
        %432 = vmatpush1.msra.mxu0 0.0
        %433 = vmatprep.subr.mxu0 0.0
        %434 = vmatpush1.msra.mxu0 0.0
        %435 = vmatprep.subr.mxu0 0.0
        %436 = vmatpush1.msra.mxu0 0.0
        %437 = vmatprep.subr.mxu0 0.0
        %438 = vmatpush1.msra.mxu0 0.0
        %439 = vmatprep.subr.mxu0 0.0
        %440 = vmatpush1.msra.mxu0 0.0
        %441 = vmatprep.subr.mxu0 0.0
        %442 = vmatpush1.msra.mxu0 0.0
        %443 = vmatprep.subr.mxu0 0.0
        %444 = vmatpush1.msra.mxu0 0.0
        %445 = vmatprep.subr.mxu0 0.0
        %446 = vmatpush1.msra.mxu0 0.0
        %447 = vmatprep.subr.mxu0 0.0
        %448 = vmatpush1.msra.mxu0 0.0
        %449 = vmatprep.subr.mxu0 0.0
        %450 = vmatpush1.msra.mxu0 0.0
        %451 = vmatprep.mubr.f32.mxu0 0.0
        %452 = vmatmul.mubr.f32.gmra.mrb[0].mxu0 %v377
        %v453 = vpop.f32.mrb[0].mxu0
        %v454 = vadd.f32 %v366, %v453
        %v455 = vpop.f32.mrb[0].mxu0
        %v456 = vadd.f32 %v366, %v455
        %457 = vmatprep.mubr.f32.mxu0 0.0
        %458 = vmatmul.mubr.f32.gmra.mrb[0].mxu0 %v380
        %v459 = vpop.f32.mrb[0].mxu0
        %v460 = vadd.f32 %v371, %v459
        %v461 = vpop.f32.mrb[0].mxu0
        %v462 = vadd.f32 %v371, %v461
        %463 = vdwg.mxu0
        %s464 = scalar_lea.vmem %s3, 64
        %v465 = vld [vmem:[%s464] sm:$0xff]
        %v466 = vld [vmem:[%s464 + $0x8] sm:$0xf]
        %468 = vset.pattern.permute.xlu0 0
        %469 = vperm.xlu0 %468, %v465
        %v470 = vpop.permute.xlu0 %469
        %473 = vset.pattern.permute.xlu0 0
        %474 = vperm.xlu0 %473, %v466
        %v475 = vpop.permute.xlu0 %474
        %v477 = vmul.f32 %v470, %v454
        %v478 = vmul.f32 %v470, %v456
        %v479 = vmul.f32 %v475, %v460
        %v480 = vmul.f32 %v475, %v462
        %481 = vrot.lane.b32.xlu0 %v454, 17
        %v482 = vpop.permute.xlu0 %481
        %483 = vrot.lane.b32.xlu0 %v460, 17
        %v484 = vpop.permute.xlu0 %483
        %485 = vrot.lane.b32.xlu0 %v456, 17
        %v486 = vpop.permute.xlu0 %485
        %487 = vrot.lane.b32.xlu0 %v462, 17
        %v488 = vpop.permute.xlu0 %487
        %v489 = vlaneseq
        %v490 = vand.u32 %v489, 127
        %vm491 = vcmp.lt.s32.totalorder %v490, 17
        %v492 = vsel %vm491, %v482, %v486
        %v493 = vsel %vm491, %v484, %v488
        %v494 = vsel %vm491, %v486, %v482
        %v495 = vsel %vm491, %v488, %v484
        %v496 = vld [vmem:[%s3] sm:$0xff]
        %v497 = vld [vmem:[%s3 + $0x8] sm:$0xf]
        %499 = vset.pattern.permute.xlu0 0
        %500 = vperm.xlu0 %499, %v496
        %v501 = vpop.permute.xlu0 %500
        %504 = vset.pattern.permute.xlu0 0
        %505 = vperm.xlu0 %504, %v497
        %v506 = vpop.permute.xlu0 %505
        %v508 = vmul.f32 %v501, %v494
        %v509 = vmul.f32 %v501, %v492
        %v510 = vmul.f32 %v506, %v495
        %v511 = vmul.f32 %v506, %v493
        %v512 = vld [vmem:[%s5] sm:$0x3]
        %v514 = vlaneseq
        %v515 = vshrl.u32 %v514, 7
        %v516 = vsub.s32 0, %v515
        %v517 = vrot.slane %v512, %v516
        %v518 = vlaneseq
        %v519 = vshrl.u32 %v518, 7
        %v520 = vsub.s32 1, %v519
        %v521 = vrot.slane %v512, %v520
        %v524 = vmul.f32 %v508, %v517
        %v525 = vmul.f32 %v509, %v521
        %v526 = vmul.f32 %v510, %v517
        %v527 = vmul.f32 %v511, %v521
        %v528 = vadd.f32 %v477, %v524
        %v529 = vadd.f32 %v478, %v525
        %v530 = vadd.f32 %v479, %v526
        %v531 = vadd.f32 %v480, %v527
        %532 = vrot.lane.b32.xlu0 %v454, 16
        %v533 = vpop.permute.xlu0 %532
        %534 = vrot.lane.b32.xlu0 %v460, 16
        %v535 = vpop.permute.xlu0 %534
        %536 = vrot.lane.b32.xlu0 %v456, 16
        %v537 = vpop.permute.xlu0 %536
        %538 = vrot.lane.b32.xlu0 %v462, 16
        %v539 = vpop.permute.xlu0 %538
        %vm540 = vcmp.lt.s32.totalorder %v490, 16
        %v541 = vsel %vm540, %v533, %v537
        %v542 = vsel %vm540, %v535, %v539
        %v543 = vsel %vm540, %v537, %v533
        %v544 = vsel %vm540, %v539, %v535
        %s545 = scalar_lea.vmem %s3, 16
        %v546 = vld [vmem:[%s545] sm:$0xff]
        %v547 = vld [vmem:[%s545 + $0x8] sm:$0xf]
        %549 = vset.pattern.permute.xlu0 0
        %550 = vperm.xlu0 %549, %v546
        %v551 = vpop.permute.xlu0 %550
        %554 = vset.pattern.permute.xlu0 0
        %555 = vperm.xlu0 %554, %v547
        %v556 = vpop.permute.xlu0 %555
        %v558 = vmul.f32 %v551, %v543
        %v559 = vmul.f32 %v551, %v541
        %v560 = vmul.f32 %v556, %v544
        %v561 = vmul.f32 %v556, %v542
        %s562 = scalar_lea.vmem %s5, 2
        %v563 = vld [vmem:[%s562] sm:$0x3]
        %v565 = vlaneseq
        %v566 = vshrl.u32 %v565, 7
        %v567 = vsub.s32 0, %v566
        %v568 = vrot.slane %v563, %v567
        %v569 = vlaneseq
        %v570 = vshrl.u32 %v569, 7
        %v571 = vsub.s32 1, %v570
        %v572 = vrot.slane %v563, %v571
        %v575 = vmul.f32 %v558, %v568
        %v576 = vmul.f32 %v559, %v572
        %v577 = vmul.f32 %v560, %v568
        %v578 = vmul.f32 %v561, %v572
        %v579 = vadd.f32 %v528, %v575
        %v580 = vadd.f32 %v529, %v576
        %v581 = vadd.f32 %v530, %v577
        %v582 = vadd.f32 %v531, %v578
        %583 = vrot.lane.b32.xlu0 %v454, 15
        %v584 = vpop.permute.xlu0 %583
        %585 = vrot.lane.b32.xlu0 %v460, 15
        %v586 = vpop.permute.xlu0 %585
        %587 = vrot.lane.b32.xlu0 %v456, 15
        %v588 = vpop.permute.xlu0 %587
        %589 = vrot.lane.b32.xlu0 %v462, 15
        %v590 = vpop.permute.xlu0 %589
        %vm591 = vcmp.lt.s32.totalorder %v490, 15
        %v592 = vsel %vm591, %v584, %v588
        %v593 = vsel %vm591, %v586, %v590
        %v594 = vsel %vm591, %v588, %v584
        %v595 = vsel %vm591, %v590, %v586
        %s596 = scalar_lea.vmem %s3, 32
        %v597 = vld [vmem:[%s596] sm:$0xff]
        %v598 = vld [vmem:[%s596 + $0x8] sm:$0xf]
        %600 = vset.pattern.permute.xlu0 0
        %601 = vperm.xlu0 %600, %v597
        %v602 = vpop.permute.xlu0 %601
        %605 = vset.pattern.permute.xlu0 0
        %606 = vperm.xlu0 %605, %v598
        %v607 = vpop.permute.xlu0 %606
        %v609 = vmul.f32 %v602, %v594
        %v610 = vmul.f32 %v602, %v592
        %v611 = vmul.f32 %v607, %v595
        %v612 = vmul.f32 %v607, %v593
        %s613 = scalar_lea.vmem %s5, 4
        %v614 = vld [vmem:[%s613] sm:$0x3]
        %v616 = vlaneseq
        %v617 = vshrl.u32 %v616, 7
        %v618 = vsub.s32 0, %v617
        %v619 = vrot.slane %v614, %v618
        %v620 = vlaneseq
        %v621 = vshrl.u32 %v620, 7
        %v622 = vsub.s32 1, %v621
        %v623 = vrot.slane %v614, %v622
        %v626 = vmul.f32 %v609, %v619
        %v627 = vmul.f32 %v610, %v623
        %v628 = vmul.f32 %v611, %v619
        %v629 = vmul.f32 %v612, %v623
        %v630 = vadd.f32 %v579, %v626
        %v631 = vadd.f32 %v580, %v627
        %v632 = vadd.f32 %v581, %v628
        %v633 = vadd.f32 %v582, %v629
        %634 = vrot.lane.b32.xlu0 %v454, 1
        %v635 = vpop.permute.xlu0 %634
        %636 = vrot.lane.b32.xlu0 %v460, 1
        %v637 = vpop.permute.xlu0 %636
        %638 = vrot.lane.b32.xlu0 %v456, 1
        %v639 = vpop.permute.xlu0 %638
        %640 = vrot.lane.b32.xlu0 %v462, 1
        %v641 = vpop.permute.xlu0 %640
        %vm642 = vcmp.lt.s32.totalorder %v490, 1
        %v643 = vsel %vm642, %v635, %v639
        %v644 = vsel %vm642, %v637, %v641
        %v645 = vsel %vm642, %v639, %v635
        %v646 = vsel %vm642, %v641, %v637
        %s647 = scalar_lea.vmem %s3, 48
        %v648 = vld [vmem:[%s647] sm:$0xff]
        %v649 = vld [vmem:[%s647 + $0x8] sm:$0xf]
        %651 = vset.pattern.permute.xlu0 0
        %652 = vperm.xlu0 %651, %v648
        %v653 = vpop.permute.xlu0 %652
        %656 = vset.pattern.permute.xlu0 0
        %657 = vperm.xlu0 %656, %v649
        %v658 = vpop.permute.xlu0 %657
        %v660 = vmul.f32 %v653, %v645
        %v661 = vmul.f32 %v653, %v643
        %v662 = vmul.f32 %v658, %v646
        %v663 = vmul.f32 %v658, %v644
        %s664 = scalar_lea.vmem %s5, 6
        %v665 = vld [vmem:[%s664] sm:$0x3]
        %v667 = vlaneseq
        %v668 = vshrl.u32 %v667, 7
        %v669 = vsub.s32 0, %v668
        %v670 = vrot.slane %v665, %v669
        %v671 = vlaneseq
        %v672 = vshrl.u32 %v671, 7
        %v673 = vsub.s32 1, %v672
        %v674 = vrot.slane %v665, %v673
        %v677 = vmul.f32 %v660, %v670
        %v678 = vmul.f32 %v661, %v674
        %v679 = vmul.f32 %v662, %v670
        %v680 = vmul.f32 %v663, %v674
        %v681 = vadd.f32 %v630, %v677
        %v682 = vadd.f32 %v631, %v678
        %v683 = vadd.f32 %v632, %v679
        %v684 = vadd.f32 %v633, %v680
        %685 = vrot.lane.b32.xlu0 %v454, 127
        %v686 = vpop.permute.xlu0 %685
        %687 = vrot.lane.b32.xlu0 %v460, 127
        %v688 = vpop.permute.xlu0 %687
        %689 = vrot.lane.b32.xlu0 %v456, 127
        %v690 = vpop.permute.xlu0 %689
        %691 = vrot.lane.b32.xlu0 %v462, 127
        %v692 = vpop.permute.xlu0 %691
        %vm693 = vcmp.lt.s32.totalorder %v490, 127
        %v694 = vsel %vm693, %v686, %v690
        %v695 = vsel %vm693, %v688, %v692
        %v696 = vsel %vm693, %v690, %v686
        %v697 = vsel %vm693, %v692, %v688
        %s698 = scalar_lea.vmem %s3, 80
        %v699 = vld [vmem:[%s698] sm:$0xff]
        %v700 = vld [vmem:[%s698 + $0x8] sm:$0xf]
        %702 = vset.pattern.permute.xlu0 0
        %703 = vperm.xlu0 %702, %v699
        %v704 = vpop.permute.xlu0 %703
        %707 = vset.pattern.permute.xlu0 0
        %708 = vperm.xlu0 %707, %v700
        %v709 = vpop.permute.xlu0 %708
        %v711 = vmul.f32 %v704, %v694
        %v712 = vmul.f32 %v704, %v696
        %v713 = vmul.f32 %v709, %v695
        %v714 = vmul.f32 %v709, %v697
        %s715 = scalar_lea.vmem %s5, 10
        %v716 = vld [vmem:[%s715] sm:$0x3]
        %v718 = vlaneseq
        %v719 = vshrl.u32 %v718, 7
        %v720 = vsub.s32 0, %v719
        %v721 = vrot.slane %v716, %v720
        %v722 = vlaneseq
        %v723 = vshrl.u32 %v722, 7
        %v724 = vsub.s32 1, %v723
        %v725 = vrot.slane %v716, %v724
        %v728 = vmul.f32 %v711, %v721
        %v729 = vmul.f32 %v712, %v725
        %v730 = vmul.f32 %v713, %v721
        %v731 = vmul.f32 %v714, %v725
        %v732 = vadd.f32 %v681, %v728
        %v733 = vadd.f32 %v682, %v729
        %v734 = vadd.f32 %v683, %v730
        %v735 = vadd.f32 %v684, %v731
        %736 = vrot.lane.b32.xlu0 %v454, 113
        %v737 = vpop.permute.xlu0 %736
        %738 = vrot.lane.b32.xlu0 %v460, 113
        %v739 = vpop.permute.xlu0 %738
        %740 = vrot.lane.b32.xlu0 %v456, 113
        %v741 = vpop.permute.xlu0 %740
        %742 = vrot.lane.b32.xlu0 %v462, 113
        %v743 = vpop.permute.xlu0 %742
        %vm744 = vcmp.lt.s32.totalorder %v490, 113
        %v745 = vsel %vm744, %v737, %v741
        %v746 = vsel %vm744, %v739, %v743
        %v747 = vsel %vm744, %v741, %v737
        %v748 = vsel %vm744, %v743, %v739
        %s749 = scalar_lea.vmem %s3, 96
        %v750 = vld [vmem:[%s749] sm:$0xff]
        %v751 = vld [vmem:[%s749 + $0x8] sm:$0xf]
        %753 = vset.pattern.permute.xlu0 0
        %754 = vperm.xlu0 %753, %v750
        %v755 = vpop.permute.xlu0 %754
        %758 = vset.pattern.permute.xlu0 0
        %759 = vperm.xlu0 %758, %v751
        %v760 = vpop.permute.xlu0 %759
        %v762 = vmul.f32 %v755, %v745
        %v763 = vmul.f32 %v755, %v747
        %v764 = vmul.f32 %v760, %v746
        %v765 = vmul.f32 %v760, %v748
        %s766 = scalar_lea.vmem %s5, 12
        %v767 = vld [vmem:[%s766] sm:$0x3]
        %v769 = vlaneseq
        %v770 = vshrl.u32 %v769, 7
        %v771 = vsub.s32 0, %v770
        %v772 = vrot.slane %v767, %v771
        %v773 = vlaneseq
        %v774 = vshrl.u32 %v773, 7
        %v775 = vsub.s32 1, %v774
        %v776 = vrot.slane %v767, %v775
        %v779 = vmul.f32 %v762, %v772
        %v780 = vmul.f32 %v763, %v776
        %v781 = vmul.f32 %v764, %v772
        %v782 = vmul.f32 %v765, %v776
        %v783 = vadd.f32 %v732, %v779
        %v784 = vadd.f32 %v733, %v780
        %v785 = vadd.f32 %v734, %v781
        %v786 = vadd.f32 %v735, %v782
        %787 = vrot.lane.b32.xlu0 %v454, 112
        %v788 = vpop.permute.xlu0 %787
        %789 = vrot.lane.b32.xlu0 %v460, 112
        %v790 = vpop.permute.xlu0 %789
        %791 = vrot.lane.b32.xlu0 %v456, 112
        %v792 = vpop.permute.xlu0 %791
        %793 = vrot.lane.b32.xlu0 %v462, 112
        %v794 = vpop.permute.xlu0 %793
        %vm795 = vcmp.lt.s32.totalorder %v490, 112
        %v796 = vsel %vm795, %v788, %v792
        %v797 = vsel %vm795, %v790, %v794
        %v798 = vsel %vm795, %v792, %v788
        %v799 = vsel %vm795, %v794, %v790
        %s800 = scalar_lea.vmem %s3, 112
        %v801 = vld [vmem:[%s800] sm:$0xff]
        %v802 = vld [vmem:[%s800 + $0x8] sm:$0xf]
        %804 = vset.pattern.permute.xlu0 0
        %805 = vperm.xlu0 %804, %v801
        %v806 = vpop.permute.xlu0 %805
        %809 = vset.pattern.permute.xlu0 0
        %810 = vperm.xlu0 %809, %v802
        %v811 = vpop.permute.xlu0 %810
        %v813 = vmul.f32 %v806, %v796
        %v814 = vmul.f32 %v806, %v798
        %v815 = vmul.f32 %v811, %v797
        %v816 = vmul.f32 %v811, %v799
        %s817 = scalar_lea.vmem %s5, 14
        %v818 = vld [vmem:[%s817] sm:$0x3]
        %v820 = vlaneseq
        %v821 = vshrl.u32 %v820, 7
        %v822 = vsub.s32 0, %v821
        %v823 = vrot.slane %v818, %v822
        %v824 = vlaneseq
        %v825 = vshrl.u32 %v824, 7
        %v826 = vsub.s32 1, %v825
        %v827 = vrot.slane %v818, %v826
        %v830 = vmul.f32 %v813, %v823
        %v831 = vmul.f32 %v814, %v827
        %v832 = vmul.f32 %v815, %v823
        %v833 = vmul.f32 %v816, %v827
        %v834 = vadd.f32 %v783, %v830
        %v835 = vadd.f32 %v784, %v831
        %v836 = vadd.f32 %v785, %v832
        %v837 = vadd.f32 %v786, %v833
        %838 = vrot.lane.b32.xlu0 %v454, 111
        %v839 = vpop.permute.xlu0 %838
        %840 = vrot.lane.b32.xlu0 %v460, 111
        %v841 = vpop.permute.xlu0 %840
        %842 = vrot.lane.b32.xlu0 %v456, 111
        %v843 = vpop.permute.xlu0 %842
        %844 = vrot.lane.b32.xlu0 %v462, 111
        %v845 = vpop.permute.xlu0 %844
        %vm846 = vcmp.lt.s32.totalorder %v490, 111
        %v847 = vsel %vm846, %v839, %v843
        %v848 = vsel %vm846, %v841, %v845
        %v849 = vsel %vm846, %v843, %v839
        %v850 = vsel %vm846, %v845, %v841
        %s851 = scalar_lea.vmem %s3, 128
        %v852 = vld [vmem:[%s851] sm:$0xff]
        %v853 = vld [vmem:[%s851 + $0x8] sm:$0xf]
        %855 = vset.pattern.permute.xlu0 0
        %856 = vperm.xlu0 %855, %v852
        %v857 = vpop.permute.xlu0 %856
        %860 = vset.pattern.permute.xlu0 0
        %861 = vperm.xlu0 %860, %v853
        %v862 = vpop.permute.xlu0 %861
        %v864 = vmul.f32 %v857, %v847
        %v865 = vmul.f32 %v857, %v849
        %v866 = vmul.f32 %v862, %v848
        %v867 = vmul.f32 %v862, %v850
        %s868 = scalar_lea.vmem %s5, 16
        %v869 = vld [vmem:[%s868] sm:$0x3]
        %v871 = vlaneseq
        %v872 = vshrl.u32 %v871, 7
        %v873 = vsub.s32 0, %v872
        %v874 = vrot.slane %v869, %v873
        %v875 = vlaneseq
        %v876 = vshrl.u32 %v875, 7
        %v877 = vsub.s32 1, %v876
        %v878 = vrot.slane %v869, %v877
        %v881 = vmul.f32 %v864, %v874
        %v882 = vmul.f32 %v865, %v878
        %v883 = vmul.f32 %v866, %v874
        %v884 = vmul.f32 %v867, %v878
        %v885 = vadd.f32 %v834, %v881
        %v886 = vadd.f32 %v835, %v882
        %v887 = vadd.f32 %v836, %v883
        %v888 = vadd.f32 %v837, %v884
        %v889 = vld [vmem:[%s4] sm:$0xff]
        %v890 = vld [vmem:[%s4 + $0x8] sm:$0xf]
        %892 = vset.pattern.permute.xlu0 0
        %893 = vperm.xlu0 %892, %v889
        %v894 = vpop.permute.xlu0 %893
        %897 = vset.pattern.permute.xlu0 0
        %898 = vperm.xlu0 %897, %v890
        %v899 = vpop.permute.xlu0 %898
        %v901 = vadd.f32 %v885, %v894
        %v902 = vadd.f32 %v886, %v894
        %v903 = vadd.f32 %v887, %v899
        %v904 = vadd.f32 %v888, %v899
        %v905 = vmul.f32 %v901, %v901
        %v906 = vmul.f32 %v902, %v902
        %v907 = vsel %vm382, %v905, 0.0
        %v908 = vsel %vm382, %v906, 0.0
        %v909 = vadd.f32 %v907, %v908
        %910 = vadd.xlane.f32.xlu0 %v909
        %v911 = vpop.xlane.xlu0 %910
        %v912 = vrsqrt.pop %v911
        %v913 = vmul.f32 %v911, %v912
        %vm914 = vcmp.eq.f32.partialorder %v911, inf
        %v915 = vsel %vm914, %v911, %v913
        %vm916 = vcmp.eq.f32.partialorder %v911, 0.0
        %v917 = vand.u32 %v911, 2147483648
        %v918 = vsel %vm916, %v917, %v915
        %v919 = vmax.f32 %v918, 1e-12
        %v920 = vrcp.pop %v919
        %v921 = vmul.f32 %v901, %v920
        %v922 = vmul.f32 %v902, %v920
        %vm923 = vcmask 1047556
        %v924 = vsel %vm923, %v905, 0.0
        %v925 = vsel %vm923, %v906, 0.0
        %v926 = vadd.f32 %v924, %v925
        %927 = vadd.xlane.f32.xlu0 %v926
        %v928 = vpop.xlane.xlu0 %927
        %v929 = vrsqrt.pop %v928
        %v930 = vmul.f32 %v928, %v929
        %vm931 = vcmp.eq.f32.partialorder %v928, inf
        %v932 = vsel %vm931, %v928, %v930
        %vm933 = vcmp.eq.f32.partialorder %v928, 0.0
        %v934 = vand.u32 %v928, 2147483648
        %v935 = vsel %vm933, %v934, %v932
        %v936 = vmax.f32 %v935, 1e-12
        %v937 = vrcp.pop %v936
        %v938 = vmul.f32 %v901, %v937
        %v939 = vmul.f32 %v902, %v937
        %v940 = vld [vmem:[%s6] sm:$0xf]
        %942 = vset.pattern.permute.xlu0 0
        %943 = vperm.xlu0 %942, %v940
        %v944 = vpop.permute.xlu0 %943
        %v946 = vmul.f32 %v921, %v944
        %v947 = vmul.f32 %v922, %v944
        %v948 = vld [vmem:[%s7] sm:$0xf]
        %v951 = vrot.slane %v938, 4
        %v952 = vrot.slane %v939, 4
        %955 = vmatprep.subr.mxu0 %v952
        %956 = vmatpush1.xpose.msra.mxu0 %v951
        %957 = vmatprep.subr.mxu0 0.0
        %958 = vmatpush1.xpose.msra.mxu0 0.0
        %959 = vmatprep.subr.mxu0 0.0
        %960 = vmatpush1.xpose.msra.mxu0 0.0
        %961 = vmatprep.subr.mxu0 0.0
        %962 = vmatpush1.xpose.msra.mxu0 0.0
        %963 = vmatprep.subr.mxu0 0.0
        %964 = vmatpush1.xpose.msra.mxu0 0.0
        %965 = vmatprep.subr.mxu0 0.0
        %966 = vmatpush1.xpose.msra.mxu0 0.0
        %967 = vmatprep.subr.mxu0 0.0
        %968 = vmatpush1.xpose.msra.mxu0 0.0
        %969 = vmatprep.subr.mxu0 0.0
        %970 = vmatpush1.xpose.msra.mxu0 0.0
        %971 = vmatprep.subr.mxu0 0.0
        %972 = vmatpush1.xpose.msra.mxu0 0.0
        %973 = vmatprep.subr.mxu0 0.0
        %974 = vmatpush1.xpose.msra.mxu0 0.0
        %975 = vmatprep.subr.mxu0 0.0
        %976 = vmatpush1.xpose.msra.mxu0 0.0
        %977 = vmatprep.subr.mxu0 0.0
        %978 = vmatpush1.xpose.msra.mxu0 0.0
        %979 = vmatprep.subr.mxu0 0.0
        %980 = vmatpush1.xpose.msra.mxu0 0.0
        %981 = vmatprep.subr.mxu0 0.0
        %982 = vmatpush1.xpose.msra.mxu0 0.0
        %983 = vmatprep.subr.mxu0 0.0
        %984 = vmatpush1.xpose.msra.mxu0 0.0
        %985 = vmatprep.subr.mxu0 0.0
        %986 = vmatpush1.xpose.msra.mxu0 0.0
        %987 = vmatprep.subr.mxu0 0.0
        %988 = vmatpush1.xpose.msra.mxu0 0.0
        %989 = vmatprep.subr.mxu0 0.0
        %990 = vmatpush1.xpose.msra.mxu0 0.0
        %991 = vmatprep.subr.mxu0 0.0
        %992 = vmatpush1.xpose.msra.mxu0 0.0
        %993 = vmatprep.subr.mxu0 0.0
        %994 = vmatpush1.xpose.msra.mxu0 0.0
        %995 = vmatprep.subr.mxu0 0.0
        %996 = vmatpush1.xpose.msra.mxu0 0.0
        %997 = vmatprep.subr.mxu0 0.0
        %998 = vmatpush1.xpose.msra.mxu0 0.0
        %999 = vmatprep.subr.mxu0 0.0
        %1000 = vmatpush1.xpose.msra.mxu0 0.0
        %1001 = vmatprep.subr.mxu0 0.0
        %1002 = vmatpush1.xpose.msra.mxu0 0.0
        %1003 = vmatprep.subr.mxu0 0.0
        %1004 = vmatpush1.xpose.msra.mxu0 0.0
        %1005 = vmatprep.subr.mxu0 0.0
        %1006 = vmatpush1.xpose.msra.mxu0 0.0
        %1007 = vmatprep.subr.mxu0 0.0
        %1008 = vmatpush1.xpose.msra.mxu0 0.0
        %1009 = vmatprep.subr.mxu0 0.0
        %1010 = vmatpush1.xpose.msra.mxu0 0.0
        %1011 = vmatprep.subr.mxu0 0.0
        %1012 = vmatpush1.xpose.msra.mxu0 0.0
        %1013 = vmatprep.subr.mxu0 0.0
        %1014 = vmatpush1.xpose.msra.mxu0 0.0
        %1015 = vmatprep.subr.mxu0 0.0
        %1016 = vmatpush1.xpose.msra.mxu0 0.0
        %1017 = vmatprep.subr.mxu0 0.0
        %1018 = vmatpush1.xpose.msra.mxu0 0.0
        %1019 = vmatprep.mubr.f32.mxu0 %v947
        %1020 = vmatmul.mubr.f32.gmra.mrb[0].mxu0 %v946
        %v1021 = vpop.f32.mrb[0].mxu0
        %v1022 = vadd.f32 %v948, %v1021
        %v1023 = vpop.f32.mrb[0].mxu0
        %1024 = vdwg.mxu0
        %vm1025 = vcmask 27648
        %v1026 = vsel %vm1025, %v1022, -inf
        %1027 = vmax.xlane.f32.xlu0 %v1026
        %v1028 = vpop.xlane.xlu0 %1027
        %v1029 = vsub.f32 %v1022, %v1028
        %v1030 = vmul.f32 %v1029, 1.442695
        %v1031 = vpow.pop %v1030
        %v1032 = vsel %vm1025, %v1031, 0.0
        %1033 = vadd.xlane.f32.xlu0 %v1032
        %v1034 = vpop.xlane.xlu0 %1033
        %v1035 = vrcp.pop %v1034
        %v1036 = vmul.f32 %v1031, %v1035
        %v1038 = vsel %vm375, %v1036, 0
        %v1041 = vsel %vm382, %v903, 0
        %v1044 = vsel %vm382, %v904, 0
        %1046 = vmatprep.subr.mxu0 %v1044
        %1047 = vmatpush1.msra.mxu0 %v1041
        %1048 = vmatprep.subr.mxu0 0.0
        %1049 = vmatpush1.msra.mxu0 0.0
        %1050 = vmatprep.subr.mxu0 0.0
        %1051 = vmatpush1.msra.mxu0 0.0
        %1052 = vmatprep.subr.mxu0 0.0
        %1053 = vmatpush1.msra.mxu0 0.0
        %1054 = vmatprep.subr.mxu0 0.0
        %1055 = vmatpush1.msra.mxu0 0.0
        %1056 = vmatprep.subr.mxu0 0.0
        %1057 = vmatpush1.msra.mxu0 0.0
        %1058 = vmatprep.subr.mxu0 0.0
        %1059 = vmatpush1.msra.mxu0 0.0
        %1060 = vmatprep.subr.mxu0 0.0
        %1061 = vmatpush1.msra.mxu0 0.0
        %1062 = vmatprep.subr.mxu0 0.0
        %1063 = vmatpush1.msra.mxu0 0.0
        %1064 = vmatprep.subr.mxu0 0.0
        %1065 = vmatpush1.msra.mxu0 0.0
        %1066 = vmatprep.subr.mxu0 0.0
        %1067 = vmatpush1.msra.mxu0 0.0
        %1068 = vmatprep.subr.mxu0 0.0
        %1069 = vmatpush1.msra.mxu0 0.0
        %1070 = vmatprep.subr.mxu0 0.0
        %1071 = vmatpush1.msra.mxu0 0.0
        %1072 = vmatprep.subr.mxu0 0.0
        %1073 = vmatpush1.msra.mxu0 0.0
        %1074 = vmatprep.subr.mxu0 0.0
        %1075 = vmatpush1.msra.mxu0 0.0
        %1076 = vmatprep.subr.mxu0 0.0
        %1077 = vmatpush1.msra.mxu0 0.0
        %1078 = vmatprep.subr.mxu0 0.0
        %1079 = vmatpush1.msra.mxu0 0.0
        %1080 = vmatprep.subr.mxu0 0.0
        %1081 = vmatpush1.msra.mxu0 0.0
        %1082 = vmatprep.subr.mxu0 0.0
        %1083 = vmatpush1.msra.mxu0 0.0
        %1084 = vmatprep.subr.mxu0 0.0
        %1085 = vmatpush1.msra.mxu0 0.0
        %1086 = vmatprep.subr.mxu0 0.0
        %1087 = vmatpush1.msra.mxu0 0.0
        %1088 = vmatprep.subr.mxu0 0.0
        %1089 = vmatpush1.msra.mxu0 0.0
        %1090 = vmatprep.subr.mxu0 0.0
        %1091 = vmatpush1.msra.mxu0 0.0
        %1092 = vmatprep.subr.mxu0 0.0
        %1093 = vmatpush1.msra.mxu0 0.0
        %1094 = vmatprep.subr.mxu0 0.0
        %1095 = vmatpush1.msra.mxu0 0.0
        %1096 = vmatprep.subr.mxu0 0.0
        %1097 = vmatpush1.msra.mxu0 0.0
        %1098 = vmatprep.subr.mxu0 0.0
        %1099 = vmatpush1.msra.mxu0 0.0
        %1100 = vmatprep.subr.mxu0 0.0
        %1101 = vmatpush1.msra.mxu0 0.0
        %1102 = vmatprep.subr.mxu0 0.0
        %1103 = vmatpush1.msra.mxu0 0.0
        %1104 = vmatprep.subr.mxu0 0.0
        %1105 = vmatpush1.msra.mxu0 0.0
        %1106 = vmatprep.subr.mxu0 0.0
        %1107 = vmatpush1.msra.mxu0 0.0
        %1108 = vmatprep.subr.mxu0 0.0
        %1109 = vmatpush1.msra.mxu0 0.0
        %1110 = vmatprep.mubr.f32.mxu0 0.0
        %1111 = vmatmul.mubr.f32.gmra.mrb[0].mxu0 %v1038
        %v1112 = vpop.f32.mrb[0].mxu0
        %v1113 = vadd.f32 0.0, %v1112
        %v1114 = vpop.f32.mrb[0].mxu0
        %v1115 = vadd.f32 0.0, %v1114
        %1116 = vdwg.mxu0
        %v1117 = vld [vmem:[%s8] sm:$0xf]
        %v1118 = vld [vmem:[%s9] sm:$0xf]
        %1120 = vset.pattern.permute.xlu0 0
        %1121 = vperm.xlu0 %1120, %v1118
        %v1122 = vpop.permute.xlu0 %1121
        %v1125 = vsel %vm375, %v1117, 0
        %v1128 = vsel %vm382, %v1113, 0
        %v1131 = vsel %vm382, %v1115, 0
        %1133 = vmatprep.subr.mxu0 %v1131
        %1134 = vmatpush1.msra.mxu0 %v1128
        %1135 = vmatprep.subr.mxu0 0.0
        %1136 = vmatpush1.msra.mxu0 0.0
        %1137 = vmatprep.subr.mxu0 0.0
        %1138 = vmatpush1.msra.mxu0 0.0
        %1139 = vmatprep.subr.mxu0 0.0
        %1140 = vmatpush1.msra.mxu0 0.0
        %1141 = vmatprep.subr.mxu0 0.0
        %1142 = vmatpush1.msra.mxu0 0.0
        %1143 = vmatprep.subr.mxu0 0.0
        %1144 = vmatpush1.msra.mxu0 0.0
        %1145 = vmatprep.subr.mxu0 0.0
        %1146 = vmatpush1.msra.mxu0 0.0
        %1147 = vmatprep.subr.mxu0 0.0
        %1148 = vmatpush1.msra.mxu0 0.0
        %1149 = vmatprep.subr.mxu0 0.0
        %1150 = vmatpush1.msra.mxu0 0.0
        %1151 = vmatprep.subr.mxu0 0.0
        %1152 = vmatpush1.msra.mxu0 0.0
        %1153 = vmatprep.subr.mxu0 0.0
        %1154 = vmatpush1.msra.mxu0 0.0
        %1155 = vmatprep.subr.mxu0 0.0
        %1156 = vmatpush1.msra.mxu0 0.0
        %1157 = vmatprep.subr.mxu0 0.0
        %1158 = vmatpush1.msra.mxu0 0.0
        %1159 = vmatprep.subr.mxu0 0.0
        %1160 = vmatpush1.msra.mxu0 0.0
        %1161 = vmatprep.subr.mxu0 0.0
        %1162 = vmatpush1.msra.mxu0 0.0
        %1163 = vmatprep.subr.mxu0 0.0
        %1164 = vmatpush1.msra.mxu0 0.0
        %1165 = vmatprep.subr.mxu0 0.0
        %1166 = vmatpush1.msra.mxu0 0.0
        %1167 = vmatprep.subr.mxu0 0.0
        %1168 = vmatpush1.msra.mxu0 0.0
        %1169 = vmatprep.subr.mxu0 0.0
        %1170 = vmatpush1.msra.mxu0 0.0
        %1171 = vmatprep.subr.mxu0 0.0
        %1172 = vmatpush1.msra.mxu0 0.0
        %1173 = vmatprep.subr.mxu0 0.0
        %1174 = vmatpush1.msra.mxu0 0.0
        %1175 = vmatprep.subr.mxu0 0.0
        %1176 = vmatpush1.msra.mxu0 0.0
        %1177 = vmatprep.subr.mxu0 0.0
        %1178 = vmatpush1.msra.mxu0 0.0
        %1179 = vmatprep.subr.mxu0 0.0
        %1180 = vmatpush1.msra.mxu0 0.0
        %1181 = vmatprep.subr.mxu0 0.0
        %1182 = vmatpush1.msra.mxu0 0.0
        %1183 = vmatprep.subr.mxu0 0.0
        %1184 = vmatpush1.msra.mxu0 0.0
        %1185 = vmatprep.subr.mxu0 0.0
        %1186 = vmatpush1.msra.mxu0 0.0
        %1187 = vmatprep.subr.mxu0 0.0
        %1188 = vmatpush1.msra.mxu0 0.0
        %1189 = vmatprep.subr.mxu0 0.0
        %1190 = vmatpush1.msra.mxu0 0.0
        %1191 = vmatprep.subr.mxu0 0.0
        %1192 = vmatpush1.msra.mxu0 0.0
        %1193 = vmatprep.subr.mxu0 0.0
        %1194 = vmatpush1.msra.mxu0 0.0
        %1195 = vmatprep.subr.mxu0 0.0
        %1196 = vmatpush1.msra.mxu0 0.0
        %1197 = vmatprep.mubr.f32.mxu0 0.0
        %1198 = vmatmul.mubr.f32.gmra.mrb[0].mxu0 %v1125
        %v1199 = vpop.f32.mrb[0].mxu0
        %v1200 = vadd.f32 %v1122, %v1199
        %v1201 = vpop.f32.mrb[0].mxu0
        %v1202 = vadd.f32 %v1122, %v1201
        %1203 = vdwg.mxu0
        %v1206 = vcombine.low %v1200, %v1202
        %1208 = vst [vmem:[%s352] sm:$0xff] %v1206
        %s1209 = sand.u32 %s247, 1
        %s1210 = scalar_lea.sflag [#allocation3], %s1209
        %s1211 = sand.u32 %s247, 1
        %s1212 = smul.addr %s1211, 8
        %s1213 = scalar_lea.vmem [#allocation2], %s1212
        // Predicated region
        $region61: #{tpu_custom_call.1} parent=59 // pred_check
          %p1214 = pneg %p257
        $region62: #{tpu_custom_call.1} parent=59 // pred_check_branch
          %1216 = sbr.rel (%p1214) target = $region64
        $region63: #{tpu_custom_call.1} parent=59 // pred_region
          %s1218 = ssub.s32 128, 128
          %1219 = vsyncadd %s1210, %s1218
          %s1220 = smul.addr %s24, 2
          %s1221 = smul.addr %s1220, 64
          %s1222 = scalar_lea.hbm %s10, %s1221
          %s1224 = sshll.u32 %s1213, 4
          %s1225 = int_to_ptr.vmem [resolvable:$true] %s1224
          %1227 = dma.vmem_to_hbm [thread:$0]  %s1225, 128, %s1222, %s1210
        $region64: #{tpu_custom_call.1} parent=59 // pred_fallthru
          _
      $region60: #{tpu_custom_call.1} parent=5 // pred_fallthru
        _
      %p1228 = scmp.le.s32.totalorder 2, %s19
      // Predicated region
      $region65: #{tpu_custom_call.1} parent=5 // pred_check
        %p1229 = pneg %p1228
      $region66: #{tpu_custom_call.1} parent=5 // pred_check_branch
        %1231 = sbr.rel (%p1229) target = $region68
      $region67: #{tpu_custom_call.1} parent=5 // pred_region
        %s1232 = ssub.s32 %s19, 2
        // Predicated region
        $region69: #{tpu_custom_call.1} parent=67 // pred_check
          %p1233 = pneg %p263
        $region70: #{tpu_custom_call.1} parent=67 // pred_check_branch
          %1235 = sbr.rel (%p1233) target = $region72
        $region71: #{tpu_custom_call.1} parent=67 // pred_region
          %s1236 = sand.u32 %s248, 1
          %s1237 = scalar_lea.sflag [#allocation3], %s1236
          %s1238 = sand.u32 %s248, 1
          %s1239 = smul.addr %s1238, 8
          %s1240 = scalar_lea.vmem [#allocation2], %s1239
          %1241 = dma.done %s1237, 128
        $region72: #{tpu_custom_call.1} parent=67 // pred_fallthru
          _
      $region68: #{tpu_custom_call.1} parent=5 // pred_fallthru
        _
    $region6: #{tpu_custom_call.1} parent=1 // loop_footer
      %s23 = sadd.s32 1, %s19
    $region7: #{tpu_custom_call.1} parent=1 // loop_footer_branch
      %18 = sbr.rel target = $region3
    $region8: #{tpu_custom_call.1} parent=1 // loop_exit
      _
    %1242 = vsyncpa [#allocation3], 1
    %s1243 = scalar_lea.sflag [#allocation3], 1
    %1244 = vsyncpa %s1243, 1

</llo_original>
